<compile_context>
chip_gen: v5e
topology: v5e:2x2
jax: 0.10.0
libtpu: 0.0.40
codegen_flags: <defaults>
</compile_context>

<pallas_src>
import functools
import math

import jax
import jax.numpy as jnp
import numpy as np
from jax import lax
from jax.experimental import pallas as pl
from jax.experimental.pallas import tpu as pltpu

_NEG_INF = -1e30          # finite fill: avoids NaN on fully-masked rows


def _round_up(n, m):
    return ((n + m - 1) // m) * m


@functools.lru_cache(maxsize=None)
def _vmem_limit_bytes():
    # v5e/v6e: 128 MiB VMEM per TensorCore; v7x: 64 MiB/TC.  Per-step working
    # sets here are only a few MiB, so this is just a safe ceiling.
    try:
        cap = int(pltpu.get_tpu_info().vmem_capacity_bytes)
    except Exception:
        cap = 64 * 1024 * 1024
    return max(32 * 1024 * 1024, min(cap * 3 // 4, 112 * 1024 * 1024))


# ----------------------------- tiled linear -----------------------------
def _linear_kernel(x_ref, w_ref, b_ref, o_ref, acc_ref):
    @pl.when(pl.program_id(2) == 0)
    def _():
        acc_ref[...] = jnp.zeros_like(acc_ref)

    # bf16 x bf16 -> f32 accumulate on the MXU
    acc_ref[...] += jnp.dot(x_ref[...], w_ref[...],
                            preferred_element_type=jnp.float32)

    @pl.when(pl.program_id(2) == pl.num_programs(2) - 1)
    def _():
        o_ref[...] = (acc_ref[...] + b_ref[...]).astype(o_ref.dtype)


def pallas_linear(x, w_t_bf16, b, *, out_dtype,
                  tm_cap=512, tn_cap=512, tk_cap=512):
    """y = x @ w_t + b.  x: (M, K) any float, w_t_bf16: (K, N) bf16, b: (N,)."""
    M, K = x.shape
    Kw, N = w_t_bf16.shape
    assert K == Kw

    # Row tile: pad rows up to the cap so the tile never collapses (no gcd).
    tm = min(tm_cap, _round_up(M, 8))
    M_pad = _round_up(M, tm)
    # Lane dims: 128-align, then largest cap-bounded divisor tile (>= 128).
    K_pad = _round_up(K, 128)
    tk = 128 * math.gcd(K_pad // 128, max(tk_cap // 128, 1))
    N_pad = _round_up(N, 128)
    tn = 128 * math.gcd(N_pad // 128, max(tn_cap // 128, 1))

    x_p = jnp.pad(x.astype(jnp.bfloat16), ((0, M_pad - M), (0, K_pad - K)))
    w_p = jnp.pad(w_t_bf16, ((0, K_pad - K), (0, N_pad - N)))
    b_p = jnp.pad(b.astype(jnp.float32).reshape(1, N), ((0, 0), (0, N_pad - N)))

    out = pl.pallas_call(
        _linear_kernel,
        out_shape=jax.ShapeDtypeStruct((M_pad, N_pad), out_dtype),
        grid_spec=pltpu.PrefetchScalarGridSpec(
            num_scalar_prefetch=0,
            grid=(M_pad // tm, N_pad // tn, K_pad // tk),
            in_specs=[
                pl.BlockSpec((tm, tk), lambda i, j, k: (i, k)),
                pl.BlockSpec((tk, tn), lambda i, j, k: (k, j)),
                pl.BlockSpec((1, tn), lambda i, j, k: (0, j)),
            ],
            out_specs=pl.BlockSpec((tm, tn), lambda i, j, k: (i, j)),
            scratch_shapes=[pltpu.VMEM((tm, tn), jnp.float32)],
        ),
        compiler_params=pltpu.CompilerParams(
            dimension_semantics=("parallel", "parallel", "arbitrary"),
            vmem_limit_bytes=_vmem_limit_bytes(),
        ),
    )(x_p, w_p, b_p)
    return out[:M, :N]


# ------------------------------ RoPE pass ------------------------------
def _rope_kernel(x_ref, cos_ref, sin_ref, o_ref):
    # x_ref: (TS, hd) bf16 slice of one q- or k-head.
    # cos/sin: (1, TS, hd) f32; q-side tables carry the 1/sqrt(hd) softmax
    # scale, sin tables carry the rotate_half sign, so this single FMA pair is
    # the whole RoPE (+ scale).  roll runs on the XLU.
    x = x_ref[...].astype(jnp.float32)
    half = x.shape[-1] // 2
    o_ref[...] = (x * cos_ref[0] +
                  pltpu.roll(x, shift=half, axis=1) * sin_ref[0]
                  ).astype(o_ref.dtype)


# ------------------------ flash attention kernel ------------------------
def _flash_attn_kernel(kv_start_ref, kv_count_ref,            # SMEM prefetch
                       q_ref, k_ref, v_ref,                   # bf16 tiles
                       segq_ref, segk_ref,                    # int32 seg ids
                       o_ref,                                 # (TQ, hd)
                       m_sc, l_sc, acc_sc):                   # f32 scratch
    del kv_start_ref                                          # used in index maps
    qi = pl.program_id(0)
    ki = pl.program_id(2)

    @pl.when(ki == 0)
    def _():
        m_sc[...] = jnp.full_like(m_sc, _NEG_INF)
        l_sc[...] = jnp.zeros_like(l_sc)
        acc_sc[...] = jnp.zeros_like(acc_sc)

    # ki beyond this q-tile's overlapping-KV-tile count is a repeated (already
    # resident) block: no DMA was issued and no compute is done.
    @pl.when(ki < kv_count_ref[qi])
    def _():
        # scores; 1/sqrt(hd) already folded into q via the RoPE tables.
        s = lax.dot_general(
            q_ref[...], k_ref[...],
            dimension_numbers=(((1,), (1,)), ((), ())),
            preferred_element_type=jnp.float32,
        )                                                       # (TQ, TK)
        mask = segq_ref[...] == segk_ref[...]                   # (TQ, TK)
        s = jnp.where(mask, s, _NEG_INF)

        m_prev = m_sc[...]
        m_new = jnp.maximum(m_prev, jnp.max(s, axis=-1, keepdims=True))
        alpha = jnp.exp(m_prev - m_new)
        p = jnp.where(mask, jnp.exp(s - m_new), 0.0)

        l_sc[...] = alpha * l_sc[...] + jnp.sum(p, axis=-1, keepdims=True)
        acc_sc[...] = alpha * acc_sc[...] + jnp.dot(
            p.astype(jnp.bfloat16), v_ref[...],
            preferred_element_type=jnp.float32)
        m_sc[...] = m_new

    @pl.when(ki == pl.num_programs(2) - 1)
    def _():
        inv_l = pl.reciprocal(l_sc[...], approx=True)
        o_ref[...] = (acc_sc[...] * inv_l).astype(o_ref.dtype)


def pallas_attention(qkv, rotary_pos_emb, cu_seqlens_np, H, hd, *,
                     tq_cap=512, tk_cap=256, out_dtype=jnp.bfloat16):
    """qkv: (S, 3*H*hd) (layout (S,3,H,hd) flattened).  Returns (S, H*hd)."""
    S = qkv.shape[0]
    dim = H * hd
    assert qkv.shape[1] == 3 * dim
    assert hd % 128 == 0, "pad head_dim to a multiple of 128 for TPU lanes"

    # ---- tiling: pad-to-multiple; tiles never collapse below 128 ----
    S_pad = _round_up(S, 128)
    TK = 128 * math.gcd(S_pad // 128, max(tk_cap // 128, 1))
    TQ = TK * math.gcd(S_pad // TK, max(tq_cap // TK, 1))
    nq, nk = S_pad // TQ, S_pad // TK

    # ---- host-side segment metadata (block-diagonal mask + tile skipping) ----
    cu = np.asarray(cu_seqlens_np).astype(np.int64)
    n_seg = len(cu) - 1
    seg = np.searchsorted(cu[1:], np.arange(S), side="right").astype(np.int32)
    seg_pad = np.full((S_pad,), n_seg, dtype=np.int32)   # pad rows: own segment
    seg_pad[:S] = seg
    q_seg = seg_pad.reshape(nq, TQ)
    k_seg = seg_pad.reshape(nk, TK)
    q_lo, q_hi = q_seg.min(1), q_seg.max(1)
    k_lo, k_hi = k_seg.min(1), k_seg.max(1)
    ovl = (k_lo[None, :] <= q_hi[:, None]) & (k_hi[None, :] >= q_lo[:, None])
    kv_start_np = ovl.argmax(axis=1).astype(np.int32)     # first overlapping k tile
    kv_count_np = ovl.sum(axis=1).astype(np.int32)        # contiguous overlap count
    nk_steps = int(kv_count_np.max())                     # <= nk: grid shrinks
    kv_start = jnp.asarray(kv_start_np)
    kv_count = jnp.asarray(kv_count_np)

    segq = jnp.asarray(seg_pad.reshape(S_pad, 1))
    segk = jnp.asarray(seg_pad.reshape(1, S_pad))

    # ---- RoPE tables: rotate_half sign + softmax scale folded in ----
    half = hd // 2
    freqs = rotary_pos_emb.astype(jnp.float32)                     # (S, hd//2)
    cos = jnp.tile(jnp.cos(freqs), (1, 2))                          # (S, hd)
    sin = jnp.tile(jnp.sin(freqs), (1, 2))
    sign = jnp.concatenate([-jnp.ones((1, half), jnp.float32),
                            jnp.ones((1, half), jnp.float32)], axis=1)
    sin = sin * sign
    scale = 1.0 / math.sqrt(hd)
    cos_tbl = jnp.pad(jnp.stack([cos * scale, cos]),                # [q-side, k-side]
                      ((0, 0), (0, S_pad - S), (0, 0)))
    sin_tbl = jnp.pad(jnp.stack([sin * scale, sin]),
                      ((0, 0), (0, S_pad - S), (0, 0)))

    qkv_p = jnp.pad(qkv.astype(jnp.bfloat16), ((0, S_pad - S), (0, 0)))
    vmem = _vmem_limit_bytes()

    # ---- pass 1: pre-rotate q & k once (never redone per KV step) ----
    qk_rot = pl.pallas_call(
        _rope_kernel,
        out_shape=jax.ShapeDtypeStruct((S_pad, 2 * dim), jnp.bfloat16),
        grid_spec=pltpu.PrefetchScalarGridSpec(
            num_scalar_prefetch=0,
            grid=(S_pad // TQ, 2 * H),
            in_specs=[
                pl.BlockSpec((TQ, hd), lambda i, j: (i, j)),           # q/k slice
                pl.BlockSpec((1, TQ, hd), lambda i, j: (j // H, i, 0)),
                pl.BlockSpec((1, TQ, hd), lambda i, j: (j // H, i, 0)),
            ],
            out_specs=pl.BlockSpec((TQ, hd), lambda i, j: (i, j)),
        ),
        compiler_params=pltpu.CompilerParams(
            dimension_semantics=("parallel", "parallel"),
            vmem_limit_bytes=vmem,
        ),
    )(qkv_p, cos_tbl, sin_tbl)

    # ---- pass 2: flash attention with block-diagonal KV-tile skipping ----
    def kv_tile(ki, kvs, kvc, qi):
        # clamp -> repeated block index for dead steps -> no DMA issued
        return kvs[qi] + jnp.minimum(ki, kvc[qi] - 1)

    def q_map(qi, h, ki, kvs, kvc): return (qi, h)
    def k_map(qi, h, ki, kvs, kvc): return (kv_tile(ki, kvs, kvc, qi), H + h)
    def v_map(qi, h, ki, kvs, kvc): return (kv_tile(ki, kvs, kvc, qi), 2 * H + h)
    def segq_map(qi, h, ki, kvs, kvc): return (qi, 0)
    def segk_map(qi, h, ki, kvs, kvc): return (0, kv_tile(ki, kvs, kvc, qi))
    def o_map(qi, h, ki, kvs, kvc): return (qi, h)

    attn = pl.pallas_call(
        _flash_attn_kernel,
        out_shape=jax.ShapeDtypeStruct((S_pad, dim), out_dtype),
        grid_spec=pltpu.PrefetchScalarGridSpec(
            num_scalar_prefetch=2,
            # q-tiles lead the parallel axes -> balanced megacore split on v7x
            grid=(nq, H, nk_steps),
            in_specs=[
                pl.BlockSpec((TQ, hd), q_map),     # pre-rotated, pre-scaled q
                pl.BlockSpec((TK, hd), k_map),     # pre-rotated k
                pl.BlockSpec((TK, hd), v_map),     # v straight from qkv
                pl.BlockSpec((TQ, 1), segq_map),
                pl.BlockSpec((1, TK), segk_map),
            ],
            out_specs=pl.BlockSpec((TQ, hd), o_map),
            scratch_shapes=[
                pltpu.VMEM((TQ, 1), jnp.float32),    # m (running max)
                pltpu.VMEM((TQ, 1), jnp.float32),    # l (running denom)
                pltpu.VMEM((TQ, hd), jnp.float32),   # acc
            ],
        ),
        compiler_params=pltpu.CompilerParams(
            dimension_semantics=("parallel", "parallel", "arbitrary"),
            vmem_limit_bytes=vmem,
        ),
    )(kv_start, kv_count, qk_rot, qk_rot, qkv_p, segq, segk)
    return attn[:S, :]


# ------------------------------ module wrapper ------------------------------
class VisionSdpaAttentionPallas:
    def __init__(self, dim: int, num_heads: int = 16, *, key):
        assert dim % num_heads == 0
        self.dim = dim
        self.num_heads = num_heads
        self.head_dim = dim // num_heads
        k1, k2, k3, k4 = jax.random.split(key, 4)
        bound = 1.0 / math.sqrt(dim)
        # nn.Linear weight layout: (out_features, in_features)
        self.qkv_w = jax.random.uniform(k1, (3 * dim, dim), jnp.float32, -bound, bound)
        self.qkv_b = jax.random.uniform(k2, (3 * dim,), jnp.float32, -bound, bound)
        self.proj_w = jax.random.uniform(k3, (dim, dim), jnp.float32, -bound, bound)
        self.proj_b = jax.random.uniform(k4, (dim,), jnp.float32, -bound, bound)
        # Pre-transpose + pre-cast once: half the weight DMA bytes per matmul.
        self.qkv_w_t = jnp.asarray(self.qkv_w.T, dtype=jnp.bfloat16)
        self.proj_w_t = jnp.asarray(self.proj_w.T, dtype=jnp.bfloat16)

    def __call__(self, hidden_states, cu_seqlens, rotary_pos_emb,
                 *, attn_tq_cap=512, attn_tk_cap=256):
        # cu_seqlens is host metadata: the block-diagonal tile-skipping grid is
        # derived from it at trace time.
        S, dim = hidden_states.shape
        H, hd = self.num_heads, self.head_dim

        # fused qkv projection -> (S, 3*dim) bf16; layout (S, 3, H, hd) flattened
        qkv = pallas_linear(hidden_states, self.qkv_w_t, self.qkv_b,
                            out_dtype=jnp.bfloat16)
        attn_out = pallas_attention(qkv, rotary_pos_emb, np.asarray(cu_seqlens),
                                    H, hd, tq_cap=attn_tq_cap, tk_cap=attn_tk_cap)
        return pallas_linear(attn_out, self.proj_w_t, self.proj_b,
                             out_dtype=jnp.float32)


# ------------------------------ pure-JAX reference ------------------------------
def reference_forward(x, cu_seqlens_np, freqs, qkv_w, qkv_b, proj_w, proj_b, H):
    S, dim = x.shape
    hd = dim // H
    qkv = x @ qkv_w.T + qkv_b
    qkv = qkv.reshape(S, 3, H, hd)
    q, k, v = qkv[:, 0], qkv[:, 1], qkv[:, 2]                 # (S, H, hd)
    cos = jnp.tile(jnp.cos(freqs), (1, 2))[:, None, :]
    sin = jnp.tile(jnp.sin(freqs), (1, 2))[:, None, :]

    def rot_half(t):
        return jnp.concatenate([-t[..., hd // 2:], t[..., : hd // 2]], axis=-1)

    q = q * cos + rot_half(q) * sin
    k = k * cos + rot_half(k) * sin

    mask = np.zeros((S, S), dtype=bool)
    for i in range(1, len(cu_seqlens_np)):
        a, b = int(cu_seqlens_np[i - 1]), int(cu_seqlens_np[i])
        mask[a:b, a:b] = True
    mask = jnp.asarray(mask)

    q = jnp.transpose(q, (1, 0, 2))
    k = jnp.transpose(k, (1, 0, 2))
    v = jnp.transpose(v, (1, 0, 2))
    s = jnp.einsum("hqd,hkd->hqk", q, k) / math.sqrt(hd)
    s = jnp.where(mask[None], s, -jnp.inf)
    p = jax.nn.softmax(s, axis=-1)
    o = jnp.einsum("hqk,hkd->hqd", p, v)
    o = jnp.transpose(o, (1, 0, 2)).reshape(S, dim)
    return o @ proj_w.T + proj_b


if __name__ == "__main__":
    key = jax.random.PRNGKey(0)
    k_param, k_x, k_f = jax.random.split(key, 3)

    # Small but tile-exercising: hd=128 (lane aligned); three segments so the
    # block-diagonal path has skipped KV tiles AND in-tile partial masks.
    S, dim, H = 512, 256, 2
    hd = dim // H

    module = VisionSdpaAttentionPallas(dim, num_heads=H, key=k_param)

    hidden_states = jax.random.normal(k_x, (S, dim), jnp.float32)
    rotary_pos_emb = jax.random.normal(k_f, (S, hd // 2), jnp.float32)
    cu_seqlens = np.array([0, 128, 200, 512], dtype=np.int32)

    # 1) small attention tiles: 4x4 tile grid, kv-steps=3 with real skipping
    #    (q-tile 0 only touches 1 KV tile) and a segment boundary inside a tile.
    out_small = module(hidden_states, cu_seqlens, rotary_pos_emb,
                       attn_tq_cap=128, attn_tk_cap=128)
    out_small = jax.block_until_ready(out_small)

    # 2) production-style tiles (TQ=512, TK=256).
    out_big = module(hidden_states, cu_seqlens, rotary_pos_emb)
    out_big = jax.block_until_ready(out_big)

    ref = reference_forward(
        hidden_states, cu_seqlens, rotary_pos_emb,
        module.qkv_w, module.qkv_b, module.proj_w, module.proj_b, H,
    )
    ref = np.asarray(jax.block_until_ready(ref))

    assert out_small.shape == (S, dim) and out_big.shape == (S, dim)
    np.testing.assert_allclose(np.asarray(out_small), ref, rtol=2e-2, atol=2e-2)
    np.testing.assert_allclose(np.asarray(out_big), ref, rtol=2e-2, atol=2e-2)
    print("KERNEL_OK")
</pallas_src>

<mosaic_0001>
module attributes {stable_mosaic.version = 11 : i64} {
  func.func @_linear_kernel(%arg0: i32, %arg1: i32, %arg2: i32, %arg3: memref<512x256xbf16, #tpu.memory_space<vmem>>, %arg4: memref<256x256xbf16, #tpu.memory_space<vmem>>, %arg5: memref<1x256xf32, #tpu.memory_space<vmem>>, %arg6: memref<512x256xbf16, #tpu.memory_space<vmem>>, %arg7: memref<512x256xf32, #tpu.memory_space<vmem>>) attributes {dimension_semantics = [#tpu.dimension_semantics<parallel>, #tpu.dimension_semantics<parallel>, #tpu.dimension_semantics<arbitrary>], iteration_bounds = array<i64: 1, 3, 1>, scalar_prefetch = 0 : i64, scratch_operands = 1 : i64, tpu.core_type = #tpu.core_type<tc>, window_params = [{transform_indices = @transform_0, window_bounds = array<i64: 512, 256>}, {transform_indices = @transform_1, window_bounds = array<i64: 256, 256>}, {transform_indices = @transform_2, window_bounds = array<i64: 1, 256>}, {transform_indices = @transform_3, window_bounds = array<i64: 512, 256>}]} {
    %c0_i32 = arith.constant 0 : i32
    %0 = arith.cmpi eq, %arg2, %c0_i32 : i32
    %1 = arith.extui %0 : i1 to i32
    %c0_i32_0 = arith.constant 0 : i32
    %2 = arith.cmpi ne, %1, %c0_i32_0 : i32
    scf.if %2 {
      %cst_10 = arith.constant 0.000000e+00 : f32
      %12 = vector.broadcast %cst_10 : f32 to vector<512x256xf32>
      %c0_11 = arith.constant 0 : index
      %c0_12 = arith.constant 0 : index
      %13 = vector.load %arg7[%c0_11, %c0_12] : memref<512x256xf32, #tpu.memory_space<vmem>>, vector<512x256xf32>
      tpu.vector_store %arg7[%c0_11, %c0_12], %12 {strides = array<i32>} : memref<512x256xf32, #tpu.memory_space<vmem>>, vector<512x256xf32>,
    } else {
    }
    %c0 = arith.constant 0 : index
    %c0_1 = arith.constant 0 : index
    %3 = vector.load %arg7[%c0, %c0_1] : memref<512x256xf32, #tpu.memory_space<vmem>>, vector<512x256xf32>
    %c0_2 = arith.constant 0 : index
    %c0_3 = arith.constant 0 : index
    %4 = vector.load %arg3[%c0_2, %c0_3] : memref<512x256xbf16, #tpu.memory_space<vmem>>, vector<512x256xbf16>
    %c0_4 = arith.constant 0 : index
    %c0_5 = arith.constant 0 : index
    %5 = vector.load %arg4[%c0_4, %c0_5] : memref<256x256xbf16, #tpu.memory_space<vmem>>, vector<256x256xbf16>
    %cst = arith.constant dense<0.000000e+00> : vector<512x256xf32>
    %6 = tpu.matmul %4, %5, %cst {dimension_numbers = #tpu.dot_dimension_numbers<[1], [0], [0], [1], [0, 0, 1, 1], [], []>} : vector<512x256xbf16>, vector<256x256xbf16>, vector<512x256xf32> -> vector<512x256xf32>
    %7 = arith.addf %3, %6 : vector<512x256xf32>
    %c0_6 = arith.constant 0 : index
    %c0_7 = arith.constant 0 : index
    %8 = vector.load %arg7[%c0_6, %c0_7] : memref<512x256xf32, #tpu.memory_space<vmem>>, vector<512x256xf32>
    tpu.vector_store %arg7[%c0_6, %c0_7], %7 {strides = array<i32>} : memref<512x256xf32, #tpu.memory_space<vmem>>, vector<512x256xf32>,
    %c0_i32_8 = arith.constant 0 : i32
    %9 = arith.cmpi eq, %arg2, %c0_i32_8 : i32
    %10 = arith.extui %9 : i1 to i32
    %c0_i32_9 = arith.constant 0 : i32
    %11 = arith.cmpi ne, %10, %c0_i32_9 : i32
    scf.if %11 {
      %c0_10 = arith.constant 0 : index
      %c0_11 = arith.constant 0 : index
      %12 = vector.load %arg7[%c0_10, %c0_11] : memref<512x256xf32, #tpu.memory_space<vmem>>, vector<512x256xf32>
      %c0_12 = arith.constant 0 : index
      %c0_13 = arith.constant 0 : index
      %13 = vector.load %arg5[%c0_12, %c0_13] : memref<1x256xf32, #tpu.memory_space<vmem>>, vector<1x256xf32>
      %14 = vector.broadcast %13 : vector<1x256xf32> to vector<512x256xf32>
      %15 = arith.addf %12, %14 : vector<512x256xf32>
      %16 = arith.truncf %15 : vector<512x256xf32> to vector<512x256xbf16>
      %c0_14 = arith.constant 0 : index
      %c0_15 = arith.constant 0 : index
      %17 = vector.load %arg6[%c0_14, %c0_15] : memref<512x256xbf16, #tpu.memory_space<vmem>>, vector<512x256xbf16>
      tpu.vector_store %arg6[%c0_14, %c0_15], %16 {strides = array<i32>} : memref<512x256xbf16, #tpu.memory_space<vmem>>, vector<512x256xbf16>,
    } else {
    }
    return
  }
  func.func @transform_0(%arg0: i32, %arg1: i32, %arg2: i32) -> (i32, i32) {
    %c0_i32 = arith.constant 0 : i32
    return %arg0, %arg2 : i32, i32
  }
  func.func @transform_1(%arg0: i32, %arg1: i32, %arg2: i32) -> (i32, i32) {
    %c0_i32 = arith.constant 0 : i32
    return %arg2, %arg1 : i32, i32
  }
  func.func @transform_2(%arg0: i32, %arg1: i32, %arg2: i32) -> (i32, i32) {
    %c0_i32 = arith.constant 0 : i32
    %c0_i32_0 = arith.constant 0 : i32
    return %c0_i32, %arg1 : i32, i32
  }
  func.func @transform_3(%arg0: i32, %arg1: i32, %arg2: i32) -> (i32, i32) {
    %c0_i32 = arith.constant 0 : i32
    return %arg0, %arg1 : i32, i32
  }
}

</mosaic_0001>

<llo_original>
// kernel: tpu_custom_call.1
$region0: #{tpu_custom_call.1}
  #allocation0 [shape = 'u32[]', space=smem, size = 0x4, offset = 0x4, fixed_abs, tag = 'smem constant byte address 0x4 - core index']
  #allocation1 [shape = 'u32[72,128]{1,0:T(1,128)}', space=vmem, size = 0x9000, scoped, tag = 'internal scratch']
  #allocation2 [shape = 'f32[512,256]{1,0:T(8,128)}', space=vmem, size = 0x80000, scoped, tag = 'scratch operand']
  %s0 = inlined_call_operand.hbm [shape: bf16[512,256], index: 0, kind: input, shape index: {}]
  %s1 = inlined_call_operand.hbm [shape: bf16[256,768], index: 1, kind: input, shape index: {}]
  %s2 = inlined_call_operand.hbm [shape: f32[1,768], index: 2, kind: input, shape index: {}]
  %s3 = inlined_call_operand.hbm [shape: bf16[512,768], index: 3, kind: output, shape index: {}]
  %s4 = sld [smem:[#allocation0]]
  $region65: #{tpu_custom_call.1} parent=0
    _
  %s6 = ssub.s32 1, %s4
  %s7 = scalar_select 0, %s6, %s4
  $region1: #{tpu_custom_call.1} parent=0
    #allocation3 [shape = 'u8[262144]{0}', space=vmem, size = 0x40000, scoped, tag = 'input window, operand 0, single buffered']
    #allocation4 [shape = 's32[2]{0}', space=sflag, size = 0x8, scoped, tag = 'scoped memory for tpu_custom_call.1']
    #allocation5 [shape = 's32[2]{0}', space=sflag, size = 0x8, scoped, tag = 'scoped memory for tpu_custom_call.1']
    #allocation6 [shape = 'u8[262144]{0}', space=vmem, size = 0x40000, scoped, tag = 'input window, operand 1']
    #allocation7 [shape = 's32[2]{0}', space=sflag, size = 0x8, scoped, tag = 'scoped memory for tpu_custom_call.1']
    #allocation8 [shape = 'u8[2048]{0}', space=vmem, size = 0x800, scoped, tag = 'input window, operand 2']
    #allocation9 [shape = 'u8[524288]{0}', space=vmem, size = 0x80000, scoped, tag = 'output window, operand 0']
    %8 = vsyncpa [#allocation4], 0
    %9 = vsyncpa [#allocation7], 0
    %s10 = scalar_lea.sflag [#allocation7], 1
    %11 = vsyncpa %s10, 0
    %12 = vsyncpa [#allocation5], 0
    %s13 = scalar_lea.sflag [#allocation5], 1
    %14 = vsyncpa %s13, 0
    loop: start=0, step=1, limit=5
    $region2: #{tpu_custom_call.1} parent=1 // loop_pre_header
      _
    $region3: #{tpu_custom_call.1} parent=1 // loop_header
      %s16 = sphi 0, %s20
      %p17 = scmp.ge.s32.totalorder %s16, 5
      %s23 = sphi 0, %s42
      %s24 = sphi 0, %s38
      %s25 = sphi 0, %s34
      %s26 = sphi 0, %s23
      %s27 = sphi 0, %s24
      %s28 = sphi 0, %s25
      %s29 = sphi 0, %s26
      %s30 = sphi 0, %s27
      %s31 = sphi 0, %s28
      %s47 = sphi 0, %s49
      %s50 = sphi 0, %s47
      %s51 = sphi 0, %s50
      %s67 = sphi 0, %s51
      %s75 = sphi 0, %s77
      %s78 = sphi 0, %s75
      %s79 = sphi 0, %s78
      %s95 = sphi 0, %s79
      %s101 = sphi 0, %s103
      %s104 = sphi 0, %s101
      %s105 = sphi 0, %s104
      %s121 = sphi 0, %s105
      %s129 = sphi 0, %s131
      %s132 = sphi 0, %s129
      %s133 = sphi 0, %s132
      %s149 = sphi 0, %s133
    $region4: #{tpu_custom_call.1} parent=1 // loop_header_branch
      %19 = sbr.rel (%p17) target = $region8
    $region5: #{tpu_custom_call.1} parent=1 // loop_body
      %s21 = ssub.s32 %s16, 1
      %s22 = ssub.s32 %s16, 2
      %s32 = sadd.s32 1, %s25
      %p33 = scmp.ge.s32.totalorder %s32, 1
      %s34 = scalar_select %p33, 0, %s32
      %s35 = sadd.s32 1, %s24
      %s36 = scalar_select %p33, %s35, %s24
      %p37 = scmp.ge.s32.totalorder %s36, 3
      %s38 = scalar_select %p37, 0, %s36
      %s39 = sadd.s32 1, %s23
      %s40 = scalar_select %p37, %s39, %s23
      %p41 = scmp.ge.s32.totalorder %s40, 1
      %s42 = scalar_select %p41, 0, %s40
      %s43 = ssub.s32 %s23, %s42
      %s44 = ssub.s32 %s25, %s34
      %s45 = sor.u32 %s43, %s44
      %p46 = scmp.eq.s32.totalorder %s45, 0
      %s48 = sadd.s32 %s47, 1
      %s49 = scalar_select %p46, %s47, %s48
      %p52 = pneg %p46
      %p53 = scmp.eq.s32.totalorder %s16, 2
      %p54 = por %p52, %p53
      %p55 = scmp.ne.s32.totalorder %s47, %s50
      %p56 = scmp.eq.s32.totalorder %s16, 0
      %p57 = por %p55, %p56
      %p58 = scmp.ne.s32.totalorder %s47, %s50
      %p59 = scmp.eq.s32.totalorder %s21, 2
      %p60 = por %p58, %p59
      %p61 = scmp.ne.s32.totalorder %s50, %s51
      %p62 = scmp.eq.s32.totalorder %s21, 0
      %p63 = por %p61, %p62
      %p64 = scmp.ne.s32.totalorder %s50, %s51
      %p65 = scmp.eq.s32.totalorder %s22, 2
      %p66 = por %p64, %p65
      %p68 = scmp.ne.s32.totalorder %s51, %s67
      %p69 = scmp.eq.s32.totalorder %s22, 0
      %p70 = por %p68, %p69
      %s71 = ssub.s32 %s25, %s34
      %s72 = ssub.s32 %s24, %s38
      %s73 = sor.u32 %s71, %s72
      %p74 = scmp.eq.s32.totalorder %s73, 0
      %s76 = sadd.s32 %s75, 1
      %s77 = scalar_select %p74, %s75, %s76
      %p80 = pneg %p74
      %p81 = scmp.eq.s32.totalorder %s16, 2
      %p82 = por %p80, %p81
      %p83 = scmp.ne.s32.totalorder %s75, %s78
      %p84 = scmp.eq.s32.totalorder %s16, 0
      %p85 = por %p83, %p84
      %p86 = scmp.ne.s32.totalorder %s75, %s78
      %p87 = scmp.eq.s32.totalorder %s21, 2
      %p88 = por %p86, %p87
      %p89 = scmp.ne.s32.totalorder %s78, %s79
      %p90 = scmp.eq.s32.totalorder %s21, 0
      %p91 = por %p89, %p90
      %p92 = scmp.ne.s32.totalorder %s78, %s79
      %p93 = scmp.eq.s32.totalorder %s22, 2
      %p94 = por %p92, %p93
      %p96 = scmp.ne.s32.totalorder %s79, %s95
      %p97 = scmp.eq.s32.totalorder %s22, 0
      %p98 = por %p96, %p97
      %s99 = ssub.s32 %s24, %s38
      %p100 = scmp.eq.s32.totalorder %s99, 0
      %s102 = sadd.s32 %s101, 1
      %s103 = scalar_select %p100, %s101, %s102
      %p106 = pneg %p100
      %p107 = scmp.eq.s32.totalorder %s16, 2
      %p108 = por %p106, %p107
      %p109 = scmp.ne.s32.totalorder %s101, %s104
      %p110 = scmp.eq.s32.totalorder %s16, 0
      %p111 = por %p109, %p110
      %p112 = scmp.ne.s32.totalorder %s101, %s104
      %p113 = scmp.eq.s32.totalorder %s21, 2
      %p114 = por %p112, %p113
      %p115 = scmp.ne.s32.totalorder %s104, %s105
      %p116 = scmp.eq.s32.totalorder %s21, 0
      %p117 = por %p115, %p116
      %p118 = scmp.ne.s32.totalorder %s104, %s105
      %p119 = scmp.eq.s32.totalorder %s22, 2
      %p120 = por %p118, %p119
      %p122 = scmp.ne.s32.totalorder %s105, %s121
      %p123 = scmp.eq.s32.totalorder %s22, 0
      %p124 = por %p122, %p123
      %s125 = ssub.s32 %s23, %s42
      %s126 = ssub.s32 %s24, %s38
      %s127 = sor.u32 %s125, %s126
      %p128 = scmp.eq.s32.totalorder %s127, 0
      %s130 = sadd.s32 %s129, 1
      %s131 = scalar_select %p128, %s129, %s130
      %p134 = pneg %p128
      %p135 = scmp.eq.s32.totalorder %s16, 2
      %p136 = por %p134, %p135
      %p137 = scmp.ne.s32.totalorder %s129, %s132
      %p138 = scmp.eq.s32.totalorder %s16, 0
      %p139 = por %p137, %p138
      %p140 = scmp.ne.s32.totalorder %s129, %s132
      %p141 = scmp.eq.s32.totalorder %s21, 2
      %p142 = por %p140, %p141
      %p143 = scmp.ne.s32.totalorder %s132, %s133
      %p144 = scmp.eq.s32.totalorder %s21, 0
      %p145 = por %p143, %p144
      %p146 = scmp.ne.s32.totalorder %s132, %s133
      %p147 = scmp.eq.s32.totalorder %s22, 2
      %p148 = por %p146, %p147
      %p150 = scmp.ne.s32.totalorder %s133, %s149
      %p151 = scmp.eq.s32.totalorder %s22, 0
      %p152 = por %p150, %p151
      %p153 = scmp.le.s32.totalorder 1, %s16
      %p154 = scmp.lt.s32.totalorder %s16, 4
      %p155 = pnand %p153, %p154
      %p156 = pneg %p155
      // Predicated region
      $region9: #{tpu_custom_call.1} parent=5 // pred_check
        _
      $region10: #{tpu_custom_call.1} parent=5 // pred_check_branch
        %158 = sbr.rel (%p155) target = $region12
      $region11: #{tpu_custom_call.1} parent=5 // pred_region
        %s159 = ssub.s32 %s16, 1
        // Predicated region
        $region13: #{tpu_custom_call.1} parent=11 // pred_check
          %p160 = pneg %p63
        $region14: #{tpu_custom_call.1} parent=11 // pred_check_branch
          %162 = sbr.rel (%p160) target = $region16
        $region15: #{tpu_custom_call.1} parent=11 // pred_region
          %s163 = smul.u32 64, %s26
          %s164 = smul.u32 2, %s28
          %166 = vsyncadd [#allocation4], 0
          %s167 = smul.addr %s163, 2
          %s168 = sadd.s32 %s164, %s167
          %s169 = smul.addr %s168, 4
          %s170 = scalar_lea.hbm %s0, %s169
          %s171 = sshll.u32 %s170, 4
          %s172 = int_to_ptr.hbm [resolvable:$true] %s171
          %s173 = sshll.u32 [#allocation3], 4
          %s174 = int_to_ptr.vmem [resolvable:$true] %s173
          %179 = dma.hbm_to_vmem [thread:$0]  %s172, 8192, %s174, [#allocation4], 128, 128, 8
        $region16: #{tpu_custom_call.1} parent=11 // pred_fallthru
          _
      $region12: #{tpu_custom_call.1} parent=5 // pred_fallthru
        _
      %p180 = scmp.lt.s32.totalorder %s16, 3
      // Predicated region
      $region17: #{tpu_custom_call.1} parent=5 // pred_check
        %p181 = pneg %p180
      $region18: #{tpu_custom_call.1} parent=5 // pred_check_branch
        %183 = sbr.rel (%p181) target = $region20
      $region19: #{tpu_custom_call.1} parent=5 // pred_region
        // Predicated region
        $region21: #{tpu_custom_call.1} parent=19 // pred_check
          %p184 = pneg %p85
        $region22: #{tpu_custom_call.1} parent=19 // pred_check_branch
          %186 = sbr.rel (%p184) target = $region24
        $region23: #{tpu_custom_call.1} parent=19 // pred_region
          %s187 = sand.u32 %s16, 1
          %s188 = scalar_lea.sflag [#allocation7], %s187
          %s189 = sand.u32 %s75, 1
          %s190 = smul.addr %s189, 256
          %s191 = scalar_lea.vmem [#allocation6], %s190
          %s192 = smul.u32 32, %s25
          %s193 = smul.u32 2, %s24
          %195 = vsyncadd %s188, 0
          %s196 = smul.addr %s192, 6
          %s197 = sadd.s32 %s193, %s196
          %s198 = smul.addr %s197, 4
          %s199 = scalar_lea.hbm %s1, %s198
          %s200 = sshll.u32 %s199, 4
          %s201 = int_to_ptr.hbm [resolvable:$true] %s200
          %s202 = sshll.u32 %s191, 4
          %s203 = int_to_ptr.vmem [resolvable:$true] %s202
          %208 = dma.hbm_to_vmem [thread:$0]  %s201, 4096, %s203, %s188, 384, 128, 8
        $region24: #{tpu_custom_call.1} parent=19 // pred_fallthru
          _
        // Predicated region
        $region25: #{tpu_custom_call.1} parent=19 // pred_check
          %p209 = pneg %p111
        $region26: #{tpu_custom_call.1} parent=19 // pred_check_branch
          %211 = sbr.rel (%p209) target = $region28
        $region27: #{tpu_custom_call.1} parent=19 // pred_region
          %s212 = sand.u32 %s16, 1
          %s213 = scalar_lea.sflag [#allocation7], %s212
          %s214 = sand.u32 %s101, 1
          %s215 = smul.addr %s214, 2
          %s216 = scalar_lea.vmem [#allocation8], %s215
          %s217 = smul.u32 2, %s24
          %219 = vsyncadd %s213, 0
          %s220 = scalar_lea.hbm %s2, %s217
          %s222 = sshll.u32 %s220, 4
          %s223 = int_to_ptr.hbm [resolvable:$true] %s222
          %s224 = sshll.u32 %s216, 4
          %s225 = int_to_ptr.vmem [resolvable:$true] %s224
          %227 = dma.hbm_to_vmem [thread:$0]  %s223, 32, %s225, %s213
        $region28: #{tpu_custom_call.1} parent=19 // pred_fallthru
          _
      $region20: #{tpu_custom_call.1} parent=5 // pred_fallthru
        _
      %p228 = scmp.le.s32.totalorder 1, %s16
      %p229 = scmp.lt.s32.totalorder %s16, 4
      %p230 = pnand %p228, %p229
      %p231 = pneg %p230
      // Predicated region
      $region29: #{tpu_custom_call.1} parent=5 // pred_check
        _
      $region30: #{tpu_custom_call.1} parent=5 // pred_check_branch
        %233 = sbr.rel (%p230) target = $region32
      $region31: #{tpu_custom_call.1} parent=5 // pred_region
        %s234 = ssub.s32 %s16, 1
        // Predicated region
        $region33: #{tpu_custom_call.1} parent=31 // pred_check
          %p235 = pneg %p63
        $region34: #{tpu_custom_call.1} parent=31 // pred_check_branch
          %237 = sbr.rel (%p235) target = $region36
        $region35: #{tpu_custom_call.1} parent=31 // pred_region
          %239 = dma.done [#allocation4], 8192
        $region36: #{tpu_custom_call.1} parent=31 // pred_fallthru
          _
        %s240 = sand.u32 %s21, 1
        %s241 = scalar_lea.sflag [#allocation7], %s240
        %s242 = sand.u32 %s78, 1
        %s243 = smul.addr %s242, 256
        %s244 = scalar_lea.vmem [#allocation6], %s243
        // Predicated region
        $region37: #{tpu_custom_call.1} parent=31 // pred_check
          %p245 = pneg %p91
        $region38: #{tpu_custom_call.1} parent=31 // pred_check_branch
          %247 = sbr.rel (%p245) target = $region40
        $region39: #{tpu_custom_call.1} parent=31 // pred_region
          %249 = dma.done %s241, 4096
        $region40: #{tpu_custom_call.1} parent=31 // pred_fallthru
          _
        %s250 = sand.u32 %s21, 1
        %s251 = scalar_lea.sflag [#allocation7], %s250
        %s252 = sand.u32 %s104, 1
        %s253 = smul.addr %s252, 2
        %s254 = scalar_lea.vmem [#allocation8], %s253
        // Predicated region
        $region41: #{tpu_custom_call.1} parent=31 // pred_check
          %p255 = pneg %p117
        $region42: #{tpu_custom_call.1} parent=31 // pred_check_branch
          %257 = sbr.rel (%p255) target = $region44
        $region43: #{tpu_custom_call.1} parent=31 // pred_region
          %259 = dma.done %s251, 32
        $region44: #{tpu_custom_call.1} parent=31 // pred_fallthru
          _
        %p260 = pneg %p63
        %p261 = pneg %p60
        %s262 = sand.u32 %s21, 1
        %s263 = scalar_lea.sflag [#allocation7], %s262
        %s264 = sand.u32 %s78, 1
        %s265 = smul.addr %s264, 256
        %s266 = scalar_lea.vmem [#allocation6], %s265
        %p267 = pneg %p91
        %p268 = pneg %p88
        %s269 = sand.u32 %s21, 1
        %s270 = scalar_lea.sflag [#allocation7], %s269
        %s271 = sand.u32 %s104, 1
        %s272 = smul.addr %s271, 2
        %s273 = scalar_lea.vmem [#allocation8], %s272
        %p274 = pneg %p117
        %p275 = pneg %p114
        %p276 = pneg %p145
        %p277 = pneg %p142
        %s278 = sand.u32 %s132, 1
        %s279 = scalar_lea.sflag [#allocation5], %s278
        %s280 = sand.u32 %s132, 1
        %s281 = smul.addr %s280, 512
        %s282 = scalar_lea.vmem [#allocation9], %s281
        %s283 = smul.u32 64, %s26
        %s284 = smul.u32 2, %s28
        %s285 = smul.u32 32, %s28
        %s286 = smul.u32 2, %s27
        %s287 = smul.u32 2, %s27
        %s288 = smul.u32 64, %s26
        %s289 = smul.u32 2, %s27
        %p290 = scmp.eq.s32.totalorder %s28, 0
        // Predicated region
        $region45: #{tpu_custom_call.1} parent=31 // pred_check
          %p291 = pneg %p290
        $region46: #{tpu_custom_call.1} parent=31 // pred_check_branch
          %293 = sbr.rel (%p291) target = $region48
        $region47: #{tpu_custom_call.1} parent=31 // pred_region
          %294 = vst [vmem:[#allocation2] sm:$0xff] 0.0
          %295 = vst [vmem:[#allocation2 + $0x8] sm:$0xff] 0.0
          %296 = vst [vmem:[#allocation2 + $0x10] sm:$0xff] 0.0
          %297 = vst [vmem:[#allocation2 + $0x18] sm:$0xff] 0.0
          %298 = vst [vmem:[#allocation2 + $0x20] sm:$0xff] 0.0
          %299 = vst [vmem:[#allocation2 + $0x28] sm:$0xff] 0.0
          %300 = vst [vmem:[#allocation2 + $0x30] sm:$0xff] 0.0
          %301 = vst [vmem:[#allocation2 + $0x38] sm:$0xff] 0.0
          %302 = vst [vmem:[#allocation2 + $0x40] sm:$0xff] 0.0
          %303 = vst [vmem:[#allocation2 + $0x48] sm:$0xff] 0.0
          %304 = vst [vmem:[#allocation2 + $0x50] sm:$0xff] 0.0
          %305 = vst [vmem:[#allocation2 + $0x58] sm:$0xff] 0.0
          %306 = vst [vmem:[#allocation2 + $0x60] sm:$0xff] 0.0
          %307 = vst [vmem:[#allocation2 + $0x68] sm:$0xff] 0.0
          %308 = vst [vmem:[#allocation2 + $0x70] sm:$0xff] 0.0
          %309 = vst [vmem:[#allocation2 + $0x78] sm:$0xff] 0.0
          %310 = vst [vmem:[#allocation2 + $0x80] sm:$0xff] 0.0
          %311 = vst [vmem:[#allocation2 + $0x88] sm:$0xff] 0.0
          %312 = vst [vmem:[#allocation2 + $0x90] sm:$0xff] 0.0
          %313 = vst [vmem:[#allocation2 + $0x98] sm:$0xff] 0.0
          %314 = vst [vmem:[#allocation2 + $0xa0] sm:$0xff] 0.0
          %315 = vst [vmem:[#allocation2 + $0xa8] sm:$0xff] 0.0
          %316 = vst [vmem:[#allocation2 + $0xb0] sm:$0xff] 0.0
          %317 = vst [vmem:[#allocation2 + $0xb8] sm:$0xff] 0.0
          %318 = vst [vmem:[#allocation2 + $0xc0] sm:$0xff] 0.0
          %319 = vst [vmem:[#allocation2 + $0xc8] sm:$0xff] 0.0
          %320 = vst [vmem:[#allocation2 + $0xd0] sm:$0xff] 0.0
          %321 = vst [vmem:[#allocation2 + $0xd8] sm:$0xff] 0.0
          %322 = vst [vmem:[#allocation2 + $0xe0] sm:$0xff] 0.0
          %323 = vst [vmem:[#allocation2 + $0xe8] sm:$0xff] 0.0
          %324 = vst [vmem:[#allocation2 + $0xf0] sm:$0xff] 0.0
          %325 = vst [vmem:[#allocation2 + $0xf8] sm:$0xff] 0.0
          %326 = vst [vmem:[#allocation2 + $0x100] sm:$0xff] 0.0
          %327 = vst [vmem:[#allocation2 + $0x108] sm:$0xff] 0.0
          %328 = vst [vmem:[#allocation2 + $0x110] sm:$0xff] 0.0
          %329 = vst [vmem:[#allocation2 + $0x118] sm:$0xff] 0.0
          %330 = vst [vmem:[#allocation2 + $0x120] sm:$0xff] 0.0
          %331 = vst [vmem:[#allocation2 + $0x128] sm:$0xff] 0.0
          %332 = vst [vmem:[#allocation2 + $0x130] sm:$0xff] 0.0
          %333 = vst [vmem:[#allocation2 + $0x138] sm:$0xff] 0.0
          %334 = vst [vmem:[#allocation2 + $0x140] sm:$0xff] 0.0
          %335 = vst [vmem:[#allocation2 + $0x148] sm:$0xff] 0.0
          %336 = vst [vmem:[#allocation2 + $0x150] sm:$0xff] 0.0
          %337 = vst [vmem:[#allocation2 + $0x158] sm:$0xff] 0.0
          %338 = vst [vmem:[#allocation2 + $0x160] sm:$0xff] 0.0
          %339 = vst [vmem:[#allocation2 + $0x168] sm:$0xff] 0.0
          %340 = vst [vmem:[#allocation2 + $0x170] sm:$0xff] 0.0
          %341 = vst [vmem:[#allocation2 + $0x178] sm:$0xff] 0.0
          %342 = vst [vmem:[#allocation2 + $0x180] sm:$0xff] 0.0
          %343 = vst [vmem:[#allocation2 + $0x188] sm:$0xff] 0.0
          %344 = vst [vmem:[#allocation2 + $0x190] sm:$0xff] 0.0
          %345 = vst [vmem:[#allocation2 + $0x198] sm:$0xff] 0.0
          %346 = vst [vmem:[#allocation2 + $0x1a0] sm:$0xff] 0.0
          %347 = vst [vmem:[#allocation2 + $0x1a8] sm:$0xff] 0.0
          %348 = vst [vmem:[#allocation2 + $0x1b0] sm:$0xff] 0.0
          %349 = vst [vmem:[#allocation2 + $0x1b8] sm:$0xff] 0.0
          %350 = vst [vmem:[#allocation2 + $0x1c0] sm:$0xff] 0.0
          %351 = vst [vmem:[#allocation2 + $0x1c8] sm:$0xff] 0.0
          %352 = vst [vmem:[#allocation2 + $0x1d0] sm:$0xff] 0.0
          %353 = vst [vmem:[#allocation2 + $0x1d8] sm:$0xff] 0.0
          %354 = vst [vmem:[#allocation2 + $0x1e0] sm:$0xff] 0.0
          %355 = vst [vmem:[#allocation2 + $0x1e8] sm:$0xff] 0.0
          %356 = vst [vmem:[#allocation2 + $0x1f0] sm:$0xff] 0.0
          %357 = vst [vmem:[#allocation2 + $0x1f8] sm:$0xff] 0.0
          %358 = vst [vmem:[#allocation2 + $0x200] sm:$0xff] 0.0
          %359 = vst [vmem:[#allocation2 + $0x208] sm:$0xff] 0.0
          %360 = vst [vmem:[#allocation2 + $0x210] sm:$0xff] 0.0
          %361 = vst [vmem:[#allocation2 + $0x218] sm:$0xff] 0.0
          %362 = vst [vmem:[#allocation2 + $0x220] sm:$0xff] 0.0
          %363 = vst [vmem:[#allocation2 + $0x228] sm:$0xff] 0.0
          %364 = vst [vmem:[#allocation2 + $0x230] sm:$0xff] 0.0
          %365 = vst [vmem:[#allocation2 + $0x238] sm:$0xff] 0.0
          %366 = vst [vmem:[#allocation2 + $0x240] sm:$0xff] 0.0
          %367 = vst [vmem:[#allocation2 + $0x248] sm:$0xff] 0.0
          %368 = vst [vmem:[#allocation2 + $0x250] sm:$0xff] 0.0
          %369 = vst [vmem:[#allocation2 + $0x258] sm:$0xff] 0.0
          %370 = vst [vmem:[#allocation2 + $0x260] sm:$0xff] 0.0
          %371 = vst [vmem:[#allocation2 + $0x268] sm:$0xff] 0.0
          %372 = vst [vmem:[#allocation2 + $0x270] sm:$0xff] 0.0
          %373 = vst [vmem:[#allocation2 + $0x278] sm:$0xff] 0.0
          %374 = vst [vmem:[#allocation2 + $0x280] sm:$0xff] 0.0
          %375 = vst [vmem:[#allocation2 + $0x288] sm:$0xff] 0.0
          %376 = vst [vmem:[#allocation2 + $0x290] sm:$0xff] 0.0
          %377 = vst [vmem:[#allocation2 + $0x298] sm:$0xff] 0.0
          %378 = vst [vmem:[#allocation2 + $0x2a0] sm:$0xff] 0.0
          %379 = vst [vmem:[#allocation2 + $0x2a8] sm:$0xff] 0.0
          %380 = vst [vmem:[#allocation2 + $0x2b0] sm:$0xff] 0.0
          %381 = vst [vmem:[#allocation2 + $0x2b8] sm:$0xff] 0.0
          %382 = vst [vmem:[#allocation2 + $0x2c0] sm:$0xff] 0.0
          %383 = vst [vmem:[#allocation2 + $0x2c8] sm:$0xff] 0.0
          %384 = vst [vmem:[#allocation2 + $0x2d0] sm:$0xff] 0.0
          %385 = vst [vmem:[#allocation2 + $0x2d8] sm:$0xff] 0.0
          %386 = vst [vmem:[#allocation2 + $0x2e0] sm:$0xff] 0.0
          %387 = vst [vmem:[#allocation2 + $0x2e8] sm:$0xff] 0.0
          %388 = vst [vmem:[#allocation2 + $0x2f0] sm:$0xff] 0.0
          %389 = vst [vmem:[#allocation2 + $0x2f8] sm:$0xff] 0.0
          %390 = vst [vmem:[#allocation2 + $0x300] sm:$0xff] 0.0
          %391 = vst [vmem:[#allocation2 + $0x308] sm:$0xff] 0.0
          %392 = vst [vmem:[#allocation2 + $0x310] sm:$0xff] 0.0
          %393 = vst [vmem:[#allocation2 + $0x318] sm:$0xff] 0.0
          %394 = vst [vmem:[#allocation2 + $0x320] sm:$0xff] 0.0
          %395 = vst [vmem:[#allocation2 + $0x328] sm:$0xff] 0.0
          %396 = vst [vmem:[#allocation2 + $0x330] sm:$0xff] 0.0
          %397 = vst [vmem:[#allocation2 + $0x338] sm:$0xff] 0.0
          %398 = vst [vmem:[#allocation2 + $0x340] sm:$0xff] 0.0
          %399 = vst [vmem:[#allocation2 + $0x348] sm:$0xff] 0.0
          %400 = vst [vmem:[#allocation2 + $0x350] sm:$0xff] 0.0
          %401 = vst [vmem:[#allocation2 + $0x358] sm:$0xff] 0.0
          %402 = vst [vmem:[#allocation2 + $0x360] sm:$0xff] 0.0
          %403 = vst [vmem:[#allocation2 + $0x368] sm:$0xff] 0.0
          %404 = vst [vmem:[#allocation2 + $0x370] sm:$0xff] 0.0
          %405 = vst [vmem:[#allocation2 + $0x378] sm:$0xff] 0.0
          %406 = vst [vmem:[#allocation2 + $0x380] sm:$0xff] 0.0
          %407 = vst [vmem:[#allocation2 + $0x388] sm:$0xff] 0.0
          %408 = vst [vmem:[#allocation2 + $0x390] sm:$0xff] 0.0
          %409 = vst [vmem:[#allocation2 + $0x398] sm:$0xff] 0.0
          %410 = vst [vmem:[#allocation2 + $0x3a0] sm:$0xff] 0.0
          %411 = vst [vmem:[#allocation2 + $0x3a8] sm:$0xff] 0.0
          %412 = vst [vmem:[#allocation2 + $0x3b0] sm:$0xff] 0.0
          %413 = vst [vmem:[#allocation2 + $0x3b8] sm:$0xff] 0.0
          %414 = vst [vmem:[#allocation2 + $0x3c0] sm:$0xff] 0.0
          %415 = vst [vmem:[#allocation2 + $0x3c8] sm:$0xff] 0.0
          %416 = vst [vmem:[#allocation2 + $0x3d0] sm:$0xff] 0.0
          %417 = vst [vmem:[#allocation2 + $0x3d8] sm:$0xff] 0.0
          %418 = vst [vmem:[#allocation2 + $0x3e0] sm:$0xff] 0.0
          %419 = vst [vmem:[#allocation2 + $0x3e8] sm:$0xff] 0.0
          %420 = vst [vmem:[#allocation2 + $0x3f0] sm:$0xff] 0.0
          %421 = vst [vmem:[#allocation2 + $0x3f8] sm:$0xff] 0.0
        $region48: #{tpu_custom_call.1} parent=31 // pred_fallthru
          _
        %v422 = vld [vmem:[#allocation2] sm:$0xff]
        %v423 = vld [vmem:[#allocation2 + $0x8] sm:$0xff]
        %v424 = vld [vmem:[#allocation2 + $0x10] sm:$0xff]
        %v425 = vld [vmem:[#allocation2 + $0x18] sm:$0xff]
        %v426 = vld [vmem:[#allocation2 + $0x20] sm:$0xff]
        %v427 = vld [vmem:[#allocation2 + $0x28] sm:$0xff]
        %v428 = vld [vmem:[#allocation2 + $0x30] sm:$0xff]
        %v429 = vld [vmem:[#allocation2 + $0x38] sm:$0xff]
        %v430 = vld [vmem:[#allocation2 + $0x40] sm:$0xff]
        %v431 = vld [vmem:[#allocation2 + $0x48] sm:$0xff]
        %v432 = vld [vmem:[#allocation2 + $0x50] sm:$0xff]
        %v433 = vld [vmem:[#allocation2 + $0x58] sm:$0xff]
        %v434 = vld [vmem:[#allocation2 + $0x60] sm:$0xff]
        %v435 = vld [vmem:[#allocation2 + $0x68] sm:$0xff]
        %v436 = vld [vmem:[#allocation2 + $0x70] sm:$0xff]
        %v437 = vld [vmem:[#allocation2 + $0x78] sm:$0xff]
        %v438 = vld [vmem:[#allocation2 + $0x80] sm:$0xff]
        %v439 = vld [vmem:[#allocation2 + $0x88] sm:$0xff]
        %v440 = vld [vmem:[#allocation2 + $0x90] sm:$0xff]
        %v441 = vld [vmem:[#allocation2 + $0x98] sm:$0xff]
        %v442 = vld [vmem:[#allocation2 + $0xa0] sm:$0xff]
        %v443 = vld [vmem:[#allocation2 + $0xa8] sm:$0xff]
        %v444 = vld [vmem:[#allocation2 + $0xb0] sm:$0xff]
        %v445 = vld [vmem:[#allocation2 + $0xb8] sm:$0xff]
        %v446 = vld [vmem:[#allocation2 + $0xc0] sm:$0xff]
        %v447 = vld [vmem:[#allocation2 + $0xc8] sm:$0xff]
        %v448 = vld [vmem:[#allocation2 + $0xd0] sm:$0xff]
        %v449 = vld [vmem:[#allocation2 + $0xd8] sm:$0xff]
        %v450 = vld [vmem:[#allocation2 + $0xe0] sm:$0xff]
        %v451 = vld [vmem:[#allocation2 + $0xe8] sm:$0xff]
        %v452 = vld [vmem:[#allocation2 + $0xf0] sm:$0xff]
        %v453 = vld [vmem:[#allocation2 + $0xf8] sm:$0xff]
        %v454 = vld [vmem:[#allocation2 + $0x100] sm:$0xff]
        %v455 = vld [vmem:[#allocation2 + $0x108] sm:$0xff]
        %v456 = vld [vmem:[#allocation2 + $0x110] sm:$0xff]
        %v457 = vld [vmem:[#allocation2 + $0x118] sm:$0xff]
        %v458 = vld [vmem:[#allocation2 + $0x120] sm:$0xff]
        %v459 = vld [vmem:[#allocation2 + $0x128] sm:$0xff]
        %v460 = vld [vmem:[#allocation2 + $0x130] sm:$0xff]
        %v461 = vld [vmem:[#allocation2 + $0x138] sm:$0xff]
        %v462 = vld [vmem:[#allocation2 + $0x140] sm:$0xff]
        %v463 = vld [vmem:[#allocation2 + $0x148] sm:$0xff]
        %v464 = vld [vmem:[#allocation2 + $0x150] sm:$0xff]
        %v465 = vld [vmem:[#allocation2 + $0x158] sm:$0xff]
        %v466 = vld [vmem:[#allocation2 + $0x160] sm:$0xff]
        %v467 = vld [vmem:[#allocation2 + $0x168] sm:$0xff]
        %v468 = vld [vmem:[#allocation2 + $0x170] sm:$0xff]
        %v469 = vld [vmem:[#allocation2 + $0x178] sm:$0xff]
        %v470 = vld [vmem:[#allocation2 + $0x180] sm:$0xff]
        %v471 = vld [vmem:[#allocation2 + $0x188] sm:$0xff]
        %v472 = vld [vmem:[#allocation2 + $0x190] sm:$0xff]
        %v473 = vld [vmem:[#allocation2 + $0x198] sm:$0xff]
        %v474 = vld [vmem:[#allocation2 + $0x1a0] sm:$0xff]
        %v475 = vld [vmem:[#allocation2 + $0x1a8] sm:$0xff]
        %v476 = vld [vmem:[#allocation2 + $0x1b0] sm:$0xff]
        %v477 = vld [vmem:[#allocation2 + $0x1b8] sm:$0xff]
        %v478 = vld [vmem:[#allocation2 + $0x1c0] sm:$0xff]
        %v479 = vld [vmem:[#allocation2 + $0x1c8] sm:$0xff]
        %v480 = vld [vmem:[#allocation2 + $0x1d0] sm:$0xff]
        %v481 = vld [vmem:[#allocation2 + $0x1d8] sm:$0xff]
        %v482 = vld [vmem:[#allocation2 + $0x1e0] sm:$0xff]
        %v483 = vld [vmem:[#allocation2 + $0x1e8] sm:$0xff]
        %v484 = vld [vmem:[#allocation2 + $0x1f0] sm:$0xff]
        %v485 = vld [vmem:[#allocation2 + $0x1f8] sm:$0xff]
        %v486 = vld [vmem:[#allocation2 + $0x200] sm:$0xff]
        %v487 = vld [vmem:[#allocation2 + $0x208] sm:$0xff]
        %v488 = vld [vmem:[#allocation2 + $0x210] sm:$0xff]
        %v489 = vld [vmem:[#allocation2 + $0x218] sm:$0xff]
        %v490 = vld [vmem:[#allocation2 + $0x220] sm:$0xff]
        %v491 = vld [vmem:[#allocation2 + $0x228] sm:$0xff]
        %v492 = vld [vmem:[#allocation2 + $0x230] sm:$0xff]
        %v493 = vld [vmem:[#allocation2 + $0x238] sm:$0xff]
        %v494 = vld [vmem:[#allocation2 + $0x240] sm:$0xff]
        %v495 = vld [vmem:[#allocation2 + $0x248] sm:$0xff]
        %v496 = vld [vmem:[#allocation2 + $0x250] sm:$0xff]
        %v497 = vld [vmem:[#allocation2 + $0x258] sm:$0xff]
        %v498 = vld [vmem:[#allocation2 + $0x260] sm:$0xff]
        %v499 = vld [vmem:[#allocation2 + $0x268] sm:$0xff]
        %v500 = vld [vmem:[#allocation2 + $0x270] sm:$0xff]
        %v501 = vld [vmem:[#allocation2 + $0x278] sm:$0xff]
        %v502 = vld [vmem:[#allocation2 + $0x280] sm:$0xff]
        %v503 = vld [vmem:[#allocation2 + $0x288] sm:$0xff]
        %v504 = vld [vmem:[#allocation2 + $0x290] sm:$0xff]
        %v505 = vld [vmem:[#allocation2 + $0x298] sm:$0xff]
        %v506 = vld [vmem:[#allocation2 + $0x2a0] sm:$0xff]
        %v507 = vld [vmem:[#allocation2 + $0x2a8] sm:$0xff]
        %v508 = vld [vmem:[#allocation2 + $0x2b0] sm:$0xff]
        %v509 = vld [vmem:[#allocation2 + $0x2b8] sm:$0xff]
        %v510 = vld [vmem:[#allocation2 + $0x2c0] sm:$0xff]
        %v511 = vld [vmem:[#allocation2 + $0x2c8] sm:$0xff]
        %v512 = vld [vmem:[#allocation2 + $0x2d0] sm:$0xff]
        %v513 = vld [vmem:[#allocation2 + $0x2d8] sm:$0xff]
        %v514 = vld [vmem:[#allocation2 + $0x2e0] sm:$0xff]
        %v515 = vld [vmem:[#allocation2 + $0x2e8] sm:$0xff]
        %v516 = vld [vmem:[#allocation2 + $0x2f0] sm:$0xff]
        %v517 = vld [vmem:[#allocation2 + $0x2f8] sm:$0xff]
        %v518 = vld [vmem:[#allocation2 + $0x300] sm:$0xff]
        %v519 = vld [vmem:[#allocation2 + $0x308] sm:$0xff]
        %v520 = vld [vmem:[#allocation2 + $0x310] sm:$0xff]
        %v521 = vld [vmem:[#allocation2 + $0x318] sm:$0xff]
        %v522 = vld [vmem:[#allocation2 + $0x320] sm:$0xff]
        %v523 = vld [vmem:[#allocation2 + $0x328] sm:$0xff]
        %v524 = vld [vmem:[#allocation2 + $0x330] sm:$0xff]
        %v525 = vld [vmem:[#allocation2 + $0x338] sm:$0xff]
        %v526 = vld [vmem:[#allocation2 + $0x340] sm:$0xff]
        %v527 = vld [vmem:[#allocation2 + $0x348] sm:$0xff]
        %v528 = vld [vmem:[#allocation2 + $0x350] sm:$0xff]
        %v529 = vld [vmem:[#allocation2 + $0x358] sm:$0xff]
        %v530 = vld [vmem:[#allocation2 + $0x360] sm:$0xff]
        %v531 = vld [vmem:[#allocation2 + $0x368] sm:$0xff]
        %v532 = vld [vmem:[#allocation2 + $0x370] sm:$0xff]
        %v533 = vld [vmem:[#allocation2 + $0x378] sm:$0xff]
        %v534 = vld [vmem:[#allocation2 + $0x380] sm:$0xff]
        %v535 = vld [vmem:[#allocation2 + $0x388] sm:$0xff]
        %v536 = vld [vmem:[#allocation2 + $0x390] sm:$0xff]
        %v537 = vld [vmem:[#allocation2 + $0x398] sm:$0xff]
        %v538 = vld [vmem:[#allocation2 + $0x3a0] sm:$0xff]
        %v539 = vld [vmem:[#allocation2 + $0x3a8] sm:$0xff]
        %v540 = vld [vmem:[#allocation2 + $0x3b0] sm:$0xff]
        %v541 = vld [vmem:[#allocation2 + $0x3b8] sm:$0xff]
        %v542 = vld [vmem:[#allocation2 + $0x3c0] sm:$0xff]
        %v543 = vld [vmem:[#allocation2 + $0x3c8] sm:$0xff]
        %v544 = vld [vmem:[#allocation2 + $0x3d0] sm:$0xff]
        %v545 = vld [vmem:[#allocation2 + $0x3d8] sm:$0xff]
        %v546 = vld [vmem:[#allocation2 + $0x3e0] sm:$0xff]
        %v547 = vld [vmem:[#allocation2 + $0x3e8] sm:$0xff]
        %v548 = vld [vmem:[#allocation2 + $0x3f0] sm:$0xff]
        %v549 = vld [vmem:[#allocation2 + $0x3f8] sm:$0xff]
        %v550 = vld [vmem:[#allocation3] sm:$0xff]
        %v551 = vld [vmem:[#allocation3 + $0x8] sm:$0xff]
        %v552 = vld [vmem:[#allocation3 + $0x10] sm:$0xff]
        %v553 = vld [vmem:[#allocation3 + $0x18] sm:$0xff]
        %v554 = vld [vmem:[#allocation3 + $0x20] sm:$0xff]
        %v555 = vld [vmem:[#allocation3 + $0x28] sm:$0xff]
        %v556 = vld [vmem:[#allocation3 + $0x30] sm:$0xff]
        %v557 = vld [vmem:[#allocation3 + $0x38] sm:$0xff]
        %v558 = vld [vmem:[#allocation3 + $0x40] sm:$0xff]
        %v559 = vld [vmem:[#allocation3 + $0x48] sm:$0xff]
        %v560 = vld [vmem:[#allocation3 + $0x50] sm:$0xff]
        %v561 = vld [vmem:[#allocation3 + $0x58] sm:$0xff]
        %v562 = vld [vmem:[#allocation3 + $0x60] sm:$0xff]
        %v563 = vld [vmem:[#allocation3 + $0x68] sm:$0xff]
        %v564 = vld [vmem:[#allocation3 + $0x70] sm:$0xff]
        %v565 = vld [vmem:[#allocation3 + $0x78] sm:$0xff]
        %v566 = vld [vmem:[#allocation3 + $0x80] sm:$0xff]
        %v567 = vld [vmem:[#allocation3 + $0x88] sm:$0xff]
        %v568 = vld [vmem:[#allocation3 + $0x90] sm:$0xff]
        %v569 = vld [vmem:[#allocation3 + $0x98] sm:$0xff]
        %v570 = vld [vmem:[#allocation3 + $0xa0] sm:$0xff]
        %v571 = vld [vmem:[#allocation3 + $0xa8] sm:$0xff]
        %v572 = vld [vmem:[#allocation3 + $0xb0] sm:$0xff]
        %v573 = vld [vmem:[#allocation3 + $0xb8] sm:$0xff]
        %v574 = vld [vmem:[#allocation3 + $0xc0] sm:$0xff]
        %v575 = vld [vmem:[#allocation3 + $0xc8] sm:$0xff]
        %v576 = vld [vmem:[#allocation3 + $0xd0] sm:$0xff]
        %v577 = vld [vmem:[#allocation3 + $0xd8] sm:$0xff]
        %v578 = vld [vmem:[#allocation3 + $0xe0] sm:$0xff]
        %v579 = vld [vmem:[#allocation3 + $0xe8] sm:$0xff]
        %v580 = vld [vmem:[#allocation3 + $0xf0] sm:$0xff]
        %v581 = vld [vmem:[#allocation3 + $0xf8] sm:$0xff]
        %v582 = vld [vmem:[#allocation3 + $0x100] sm:$0xff]
        %v583 = vld [vmem:[#allocation3 + $0x108] sm:$0xff]
        %v584 = vld [vmem:[#allocation3 + $0x110] sm:$0xff]
        %v585 = vld [vmem:[#allocation3 + $0x118] sm:$0xff]
        %v586 = vld [vmem:[#allocation3 + $0x120] sm:$0xff]
        %v587 = vld [vmem:[#allocation3 + $0x128] sm:$0xff]
        %v588 = vld [vmem:[#allocation3 + $0x130] sm:$0xff]
        %v589 = vld [vmem:[#allocation3 + $0x138] sm:$0xff]
        %v590 = vld [vmem:[#allocation3 + $0x140] sm:$0xff]
        %v591 = vld [vmem:[#allocation3 + $0x148] sm:$0xff]
        %v592 = vld [vmem:[#allocation3 + $0x150] sm:$0xff]
        %v593 = vld [vmem:[#allocation3 + $0x158] sm:$0xff]
        %v594 = vld [vmem:[#allocation3 + $0x160] sm:$0xff]
        %v595 = vld [vmem:[#allocation3 + $0x168] sm:$0xff]
        %v596 = vld [vmem:[#allocation3 + $0x170] sm:$0xff]
        %v597 = vld [vmem:[#allocation3 + $0x178] sm:$0xff]
        %v598 = vld [vmem:[#allocation3 + $0x180] sm:$0xff]
        %v599 = vld [vmem:[#allocation3 + $0x188] sm:$0xff]
        %v600 = vld [vmem:[#allocation3 + $0x190] sm:$0xff]
        %v601 = vld [vmem:[#allocation3 + $0x198] sm:$0xff]
        %v602 = vld [vmem:[#allocation3 + $0x1a0] sm:$0xff]
        %v603 = vld [vmem:[#allocation3 + $0x1a8] sm:$0xff]
        %v604 = vld [vmem:[#allocation3 + $0x1b0] sm:$0xff]
        %v605 = vld [vmem:[#allocation3 + $0x1b8] sm:$0xff]
        %v606 = vld [vmem:[#allocation3 + $0x1c0] sm:$0xff]
        %v607 = vld [vmem:[#allocation3 + $0x1c8] sm:$0xff]
        %v608 = vld [vmem:[#allocation3 + $0x1d0] sm:$0xff]
        %v609 = vld [vmem:[#allocation3 + $0x1d8] sm:$0xff]
        %v610 = vld [vmem:[#allocation3 + $0x1e0] sm:$0xff]
        %v611 = vld [vmem:[#allocation3 + $0x1e8] sm:$0xff]
        %v612 = vld [vmem:[#allocation3 + $0x1f0] sm:$0xff]
        %v613 = vld [vmem:[#allocation3 + $0x1f8] sm:$0xff]
        %v614 = vld [vmem:[%s244] sm:$0xff]
        %v615 = vld [vmem:[%s244 + $0x8] sm:$0xff]
        %v616 = vld [vmem:[%s244 + $0x10] sm:$0xff]
        %v617 = vld [vmem:[%s244 + $0x18] sm:$0xff]
        %v618 = vld [vmem:[%s244 + $0x20] sm:$0xff]
        %v619 = vld [vmem:[%s244 + $0x28] sm:$0xff]
        %v620 = vld [vmem:[%s244 + $0x30] sm:$0xff]
        %v621 = vld [vmem:[%s244 + $0x38] sm:$0xff]
        %v622 = vld [vmem:[%s244 + $0x40] sm:$0xff]
        %v623 = vld [vmem:[%s244 + $0x48] sm:$0xff]
        %v624 = vld [vmem:[%s244 + $0x50] sm:$0xff]
        %v625 = vld [vmem:[%s244 + $0x58] sm:$0xff]
        %v626 = vld [vmem:[%s244 + $0x60] sm:$0xff]
        %v627 = vld [vmem:[%s244 + $0x68] sm:$0xff]
        %v628 = vld [vmem:[%s244 + $0x70] sm:$0xff]
        %v629 = vld [vmem:[%s244 + $0x78] sm:$0xff]
        %v630 = vld [vmem:[%s244 + $0x80] sm:$0xff]
        %v631 = vld [vmem:[%s244 + $0x88] sm:$0xff]
        %v632 = vld [vmem:[%s244 + $0x90] sm:$0xff]
        %v633 = vld [vmem:[%s244 + $0x98] sm:$0xff]
        %v634 = vld [vmem:[%s244 + $0xa0] sm:$0xff]
        %v635 = vld [vmem:[%s244 + $0xa8] sm:$0xff]
        %v636 = vld [vmem:[%s244 + $0xb0] sm:$0xff]
        %v637 = vld [vmem:[%s244 + $0xb8] sm:$0xff]
        %v638 = vld [vmem:[%s244 + $0xc0] sm:$0xff]
        %v639 = vld [vmem:[%s244 + $0xc8] sm:$0xff]
        %v640 = vld [vmem:[%s244 + $0xd0] sm:$0xff]
        %v641 = vld [vmem:[%s244 + $0xd8] sm:$0xff]
        %v642 = vld [vmem:[%s244 + $0xe0] sm:$0xff]
        %v643 = vld [vmem:[%s244 + $0xe8] sm:$0xff]
        %v644 = vld [vmem:[%s244 + $0xf0] sm:$0xff]
        %v645 = vld [vmem:[%s244 + $0xf8] sm:$0xff]
        %v710 = vunpack.c.l.b16 %v550
        %v711 = vunpack.c.h.b16 %v550
        %v712 = vunpack.c.l.b16 %v551
        %v713 = vunpack.c.h.b16 %v551
        %v714 = vunpack.c.l.b16 %v552
        %v715 = vunpack.c.h.b16 %v552
        %v716 = vunpack.c.l.b16 %v553
        %v717 = vunpack.c.h.b16 %v553
        %v718 = vunpack.c.l.b16 %v554
        %v719 = vunpack.c.h.b16 %v554
        %v720 = vunpack.c.l.b16 %v555
        %v721 = vunpack.c.h.b16 %v555
        %v722 = vunpack.c.l.b16 %v556
        %v723 = vunpack.c.h.b16 %v556
        %v724 = vunpack.c.l.b16 %v557
        %v725 = vunpack.c.h.b16 %v557
        %v726 = vunpack.c.l.b16 %v558
        %v727 = vunpack.c.h.b16 %v558
        %v728 = vunpack.c.l.b16 %v559
        %v729 = vunpack.c.h.b16 %v559
        %v730 = vunpack.c.l.b16 %v560
        %v731 = vunpack.c.h.b16 %v560
        %v732 = vunpack.c.l.b16 %v561
        %v733 = vunpack.c.h.b16 %v561
        %v734 = vunpack.c.l.b16 %v562
        %v735 = vunpack.c.h.b16 %v562
        %v736 = vunpack.c.l.b16 %v563
        %v737 = vunpack.c.h.b16 %v563
        %v738 = vunpack.c.l.b16 %v564
        %v739 = vunpack.c.h.b16 %v564
        %v740 = vunpack.c.l.b16 %v565
        %v741 = vunpack.c.h.b16 %v565
        %v742 = vunpack.c.l.b16 %v566
        %v743 = vunpack.c.h.b16 %v566
        %v744 = vunpack.c.l.b16 %v567
        %v745 = vunpack.c.h.b16 %v567
        %v746 = vunpack.c.l.b16 %v568
        %v747 = vunpack.c.h.b16 %v568
        %v748 = vunpack.c.l.b16 %v569
        %v749 = vunpack.c.h.b16 %v569
        %v750 = vunpack.c.l.b16 %v570
        %v751 = vunpack.c.h.b16 %v570
        %v752 = vunpack.c.l.b16 %v571
        %v753 = vunpack.c.h.b16 %v571
        %v754 = vunpack.c.l.b16 %v572
        %v755 = vunpack.c.h.b16 %v572
        %v756 = vunpack.c.l.b16 %v573
        %v757 = vunpack.c.h.b16 %v573
        %v758 = vunpack.c.l.b16 %v574
        %v759 = vunpack.c.h.b16 %v574
        %v760 = vunpack.c.l.b16 %v575
        %v761 = vunpack.c.h.b16 %v575
        %v762 = vunpack.c.l.b16 %v576
        %v763 = vunpack.c.h.b16 %v576
        %v764 = vunpack.c.l.b16 %v577
        %v765 = vunpack.c.h.b16 %v577
        %v766 = vunpack.c.l.b16 %v578
        %v767 = vunpack.c.h.b16 %v578
        %v768 = vunpack.c.l.b16 %v579
        %v769 = vunpack.c.h.b16 %v579
        %v770 = vunpack.c.l.b16 %v580
        %v771 = vunpack.c.h.b16 %v580
        %v772 = vunpack.c.l.b16 %v581
        %v773 = vunpack.c.h.b16 %v581
        %v774 = vunpack.c.l.b16 %v582
        %v775 = vunpack.c.h.b16 %v582
        %v776 = vunpack.c.l.b16 %v583
        %v777 = vunpack.c.h.b16 %v583
        %v778 = vunpack.c.l.b16 %v584
        %v779 = vunpack.c.h.b16 %v584
        %v780 = vunpack.c.l.b16 %v585
        %v781 = vunpack.c.h.b16 %v585
        %v782 = vunpack.c.l.b16 %v586
        %v783 = vunpack.c.h.b16 %v586
        %v784 = vunpack.c.l.b16 %v587
        %v785 = vunpack.c.h.b16 %v587
        %v786 = vunpack.c.l.b16 %v588
        %v787 = vunpack.c.h.b16 %v588
        %v788 = vunpack.c.l.b16 %v589
        %v789 = vunpack.c.h.b16 %v589
        %v790 = vunpack.c.l.b16 %v590
        %v791 = vunpack.c.h.b16 %v590
        %v792 = vunpack.c.l.b16 %v591
        %v793 = vunpack.c.h.b16 %v591
        %v794 = vunpack.c.l.b16 %v592
        %v795 = vunpack.c.h.b16 %v592
        %v796 = vunpack.c.l.b16 %v593
        %v797 = vunpack.c.h.b16 %v593
        %v798 = vunpack.c.l.b16 %v594
        %v799 = vunpack.c.h.b16 %v594
        %v800 = vunpack.c.l.b16 %v595
        %v801 = vunpack.c.h.b16 %v595
        %v802 = vunpack.c.l.b16 %v596
        %v803 = vunpack.c.h.b16 %v596
        %v804 = vunpack.c.l.b16 %v597
        %v805 = vunpack.c.h.b16 %v597
        %v806 = vunpack.c.l.b16 %v598
        %v807 = vunpack.c.h.b16 %v598
        %v808 = vunpack.c.l.b16 %v599
        %v809 = vunpack.c.h.b16 %v599
        %v810 = vunpack.c.l.b16 %v600
        %v811 = vunpack.c.h.b16 %v600
        %v812 = vunpack.c.l.b16 %v601
        %v813 = vunpack.c.h.b16 %v601
        %v814 = vunpack.c.l.b16 %v602
        %v815 = vunpack.c.h.b16 %v602
        %v816 = vunpack.c.l.b16 %v603
        %v817 = vunpack.c.h.b16 %v603
        %v818 = vunpack.c.l.b16 %v604
        %v819 = vunpack.c.h.b16 %v604
        %v820 = vunpack.c.l.b16 %v605
        %v821 = vunpack.c.h.b16 %v605
        %v822 = vunpack.c.l.b16 %v606
        %v823 = vunpack.c.h.b16 %v606
        %v824 = vunpack.c.l.b16 %v607
        %v825 = vunpack.c.h.b16 %v607
        %v826 = vunpack.c.l.b16 %v608
        %v827 = vunpack.c.h.b16 %v608
        %v828 = vunpack.c.l.b16 %v609
        %v829 = vunpack.c.h.b16 %v609
        %v830 = vunpack.c.l.b16 %v610
        %v831 = vunpack.c.h.b16 %v610
        %v832 = vunpack.c.l.b16 %v611
        %v833 = vunpack.c.h.b16 %v611
        %v834 = vunpack.c.l.b16 %v612
        %v835 = vunpack.c.h.b16 %v612
        %v836 = vunpack.c.l.b16 %v613
        %v837 = vunpack.c.h.b16 %v613
        %v838 = vpack.c.b16 %v712, %v710
        %v839 = vpack.c.b16 %v713, %v711
        %v840 = vpack.c.b16 %v716, %v714
        %v841 = vpack.c.b16 %v717, %v715
        %v842 = vpack.c.b16 %v720, %v718
        %v843 = vpack.c.b16 %v721, %v719
        %v844 = vpack.c.b16 %v724, %v722
        %v845 = vpack.c.b16 %v725, %v723
        %v846 = vpack.c.b16 %v728, %v726
        %v847 = vpack.c.b16 %v729, %v727
        %v848 = vpack.c.b16 %v732, %v730
        %v849 = vpack.c.b16 %v733, %v731
        %v850 = vpack.c.b16 %v736, %v734
        %v851 = vpack.c.b16 %v737, %v735
        %v852 = vpack.c.b16 %v740, %v738
        %v853 = vpack.c.b16 %v741, %v739
        %v854 = vpack.c.b16 %v744, %v742
        %v855 = vpack.c.b16 %v745, %v743
        %v856 = vpack.c.b16 %v748, %v746
        %v857 = vpack.c.b16 %v749, %v747
        %v858 = vpack.c.b16 %v752, %v750
        %v859 = vpack.c.b16 %v753, %v751
        %v860 = vpack.c.b16 %v756, %v754
        %v861 = vpack.c.b16 %v757, %v755
        %v862 = vpack.c.b16 %v760, %v758
        %v863 = vpack.c.b16 %v761, %v759
        %v864 = vpack.c.b16 %v764, %v762
        %v865 = vpack.c.b16 %v765, %v763
        %v866 = vpack.c.b16 %v768, %v766
        %v867 = vpack.c.b16 %v769, %v767
        %v868 = vpack.c.b16 %v772, %v770
        %v869 = vpack.c.b16 %v773, %v771
        %v870 = vpack.c.b16 %v776, %v774
        %v871 = vpack.c.b16 %v777, %v775
        %v872 = vpack.c.b16 %v780, %v778
        %v873 = vpack.c.b16 %v781, %v779
        %v874 = vpack.c.b16 %v784, %v782
        %v875 = vpack.c.b16 %v785, %v783
        %v876 = vpack.c.b16 %v788, %v786
        %v877 = vpack.c.b16 %v789, %v787
        %v878 = vpack.c.b16 %v792, %v790
        %v879 = vpack.c.b16 %v793, %v791
        %v880 = vpack.c.b16 %v796, %v794
        %v881 = vpack.c.b16 %v797, %v795
        %v882 = vpack.c.b16 %v800, %v798
        %v883 = vpack.c.b16 %v801, %v799
        %v884 = vpack.c.b16 %v804, %v802
        %v885 = vpack.c.b16 %v805, %v803
        %v886 = vpack.c.b16 %v808, %v806
        %v887 = vpack.c.b16 %v809, %v807
        %v888 = vpack.c.b16 %v812, %v810
        %v889 = vpack.c.b16 %v813, %v811
        %v890 = vpack.c.b16 %v816, %v814
        %v891 = vpack.c.b16 %v817, %v815
        %v892 = vpack.c.b16 %v820, %v818
        %v893 = vpack.c.b16 %v821, %v819
        %v894 = vpack.c.b16 %v824, %v822
        %v895 = vpack.c.b16 %v825, %v823
        %v896 = vpack.c.b16 %v828, %v826
        %v897 = vpack.c.b16 %v829, %v827
        %v898 = vpack.c.b16 %v832, %v830
        %v899 = vpack.c.b16 %v833, %v831
        %v900 = vpack.c.b16 %v836, %v834
        %v901 = vpack.c.b16 %v837, %v835
        %v998 = vunpack.c.l.b16 %v614
        %v999 = vunpack.c.h.b16 %v614
        %v1000 = vunpack.c.l.b16 %v615
        %v1001 = vunpack.c.h.b16 %v615
        %v1002 = vunpack.c.l.b16 %v616
        %v1003 = vunpack.c.h.b16 %v616
        %v1004 = vunpack.c.l.b16 %v617
        %v1005 = vunpack.c.h.b16 %v617
        %v1006 = vunpack.c.l.b16 %v618
        %v1007 = vunpack.c.h.b16 %v618
        %v1008 = vunpack.c.l.b16 %v619
        %v1009 = vunpack.c.h.b16 %v619
        %v1010 = vunpack.c.l.b16 %v620
        %v1011 = vunpack.c.h.b16 %v620
        %v1012 = vunpack.c.l.b16 %v621
        %v1013 = vunpack.c.h.b16 %v621
        %v1014 = vunpack.c.l.b16 %v622
        %v1015 = vunpack.c.h.b16 %v622
        %v1016 = vunpack.c.l.b16 %v623
        %v1017 = vunpack.c.h.b16 %v623
        %v1018 = vunpack.c.l.b16 %v624
        %v1019 = vunpack.c.h.b16 %v624
        %v1020 = vunpack.c.l.b16 %v625
        %v1021 = vunpack.c.h.b16 %v625
        %v1022 = vunpack.c.l.b16 %v626
        %v1023 = vunpack.c.h.b16 %v626
        %v1024 = vunpack.c.l.b16 %v627
        %v1025 = vunpack.c.h.b16 %v627
        %v1026 = vunpack.c.l.b16 %v628
        %v1027 = vunpack.c.h.b16 %v628
        %v1028 = vunpack.c.l.b16 %v629
        %v1029 = vunpack.c.h.b16 %v629
        %v1030 = vunpack.c.l.b16 %v630
        %v1031 = vunpack.c.h.b16 %v630
        %v1032 = vunpack.c.l.b16 %v631
        %v1033 = vunpack.c.h.b16 %v631
        %v1034 = vunpack.c.l.b16 %v632
        %v1035 = vunpack.c.h.b16 %v632
        %v1036 = vunpack.c.l.b16 %v633
        %v1037 = vunpack.c.h.b16 %v633
        %v1038 = vunpack.c.l.b16 %v634
        %v1039 = vunpack.c.h.b16 %v634
        %v1040 = vunpack.c.l.b16 %v635
        %v1041 = vunpack.c.h.b16 %v635
        %v1042 = vunpack.c.l.b16 %v636
        %v1043 = vunpack.c.h.b16 %v636
        %v1044 = vunpack.c.l.b16 %v637
        %v1045 = vunpack.c.h.b16 %v637
        %v1046 = vunpack.c.l.b16 %v638
        %v1047 = vunpack.c.h.b16 %v638
        %v1048 = vunpack.c.l.b16 %v639
        %v1049 = vunpack.c.h.b16 %v639
        %v1050 = vunpack.c.l.b16 %v640
        %v1051 = vunpack.c.h.b16 %v640
        %v1052 = vunpack.c.l.b16 %v641
        %v1053 = vunpack.c.h.b16 %v641
        %v1054 = vunpack.c.l.b16 %v642
        %v1055 = vunpack.c.h.b16 %v642
        %v1056 = vunpack.c.l.b16 %v643
        %v1057 = vunpack.c.h.b16 %v643
        %v1058 = vunpack.c.l.b16 %v644
        %v1059 = vunpack.c.h.b16 %v644
        %v1060 = vunpack.c.l.b16 %v645
        %v1061 = vunpack.c.h.b16 %v645
        %v1062 = vpack.c.b16 %v1000, %v998
        %v1063 = vpack.c.b16 %v1001, %v999
        %v1064 = vpack.c.b16 %v1004, %v1002
        %v1065 = vpack.c.b16 %v1005, %v1003
        %v1066 = vpack.c.b16 %v1008, %v1006
        %v1067 = vpack.c.b16 %v1009, %v1007
        %v1068 = vpack.c.b16 %v1012, %v1010
        %v1069 = vpack.c.b16 %v1013, %v1011
        %v1070 = vpack.c.b16 %v1016, %v1014
        %v1071 = vpack.c.b16 %v1017, %v1015
        %v1072 = vpack.c.b16 %v1020, %v1018
        %v1073 = vpack.c.b16 %v1021, %v1019
        %v1074 = vpack.c.b16 %v1024, %v1022
        %v1075 = vpack.c.b16 %v1025, %v1023
        %v1076 = vpack.c.b16 %v1028, %v1026
        %v1077 = vpack.c.b16 %v1029, %v1027
        %v1078 = vpack.c.b16 %v1032, %v1030
        %v1079 = vpack.c.b16 %v1033, %v1031
        %v1080 = vpack.c.b16 %v1036, %v1034
        %v1081 = vpack.c.b16 %v1037, %v1035
        %v1082 = vpack.c.b16 %v1040, %v1038
        %v1083 = vpack.c.b16 %v1041, %v1039
        %v1084 = vpack.c.b16 %v1044, %v1042
        %v1085 = vpack.c.b16 %v1045, %v1043
        %v1086 = vpack.c.b16 %v1048, %v1046
        %v1087 = vpack.c.b16 %v1049, %v1047
        %v1088 = vpack.c.b16 %v1052, %v1050
        %v1089 = vpack.c.b16 %v1053, %v1051
        %v1090 = vpack.c.b16 %v1056, %v1054
        %v1091 = vpack.c.b16 %v1057, %v1055
        %v1092 = vpack.c.b16 %v1060, %v1058
        %v1093 = vpack.c.b16 %v1061, %v1059
        %1126 = vmatpush.bf16.msra.mxu0 %v1076
        %1127 = vmatpush.bf16.msra.mxu0 %v1074
        %1128 = vmatpush.bf16.msra.mxu0 %v1072
        %1129 = vmatpush.bf16.msra.mxu0 %v1070
        %1130 = vmatpush.bf16.msra.mxu0 %v1068
        %1131 = vmatpush.bf16.msra.mxu0 %v1066
        %1132 = vmatpush.bf16.msra.mxu0 %v1064
        %1133 = vmatpush.bf16.msra.mxu0 %v1062
        %1134 = vmatmul.bf16.gmra.mxu0 %v838
        %v1135 = vpop.f32.mrf.mxu0
        %v1136 = vadd.f32 0.0, %v1135
        %v1137 = vpop.f32.mrf.mxu0
        %v1138 = vadd.f32 0.0, %v1137
        %1139 = vmatmul.bf16.gmra.mxu0 %v840
        %v1140 = vpop.f32.mrf.mxu0
        %v1141 = vadd.f32 0.0, %v1140
        %v1142 = vpop.f32.mrf.mxu0
        %v1143 = vadd.f32 0.0, %v1142
        %1144 = vmatmul.bf16.gmra.mxu0 %v842
        %v1145 = vpop.f32.mrf.mxu0
        %v1146 = vadd.f32 0.0, %v1145
        %v1147 = vpop.f32.mrf.mxu0
        %v1148 = vadd.f32 0.0, %v1147
        %1149 = vmatmul.bf16.gmra.mxu0 %v844
        %v1150 = vpop.f32.mrf.mxu0
        %v1151 = vadd.f32 0.0, %v1150
        %v1152 = vpop.f32.mrf.mxu0
        %v1153 = vadd.f32 0.0, %v1152
        %1154 = vmatmul.bf16.gmra.mxu0 %v846
        %v1155 = vpop.f32.mrf.mxu0
        %v1156 = vadd.f32 0.0, %v1155
        %v1157 = vpop.f32.mrf.mxu0
        %v1158 = vadd.f32 0.0, %v1157
        %1159 = vmatmul.bf16.gmra.mxu0 %v848
        %v1160 = vpop.f32.mrf.mxu0
        %v1161 = vadd.f32 0.0, %v1160
        %v1162 = vpop.f32.mrf.mxu0
        %v1163 = vadd.f32 0.0, %v1162
        %1164 = vmatmul.bf16.gmra.mxu0 %v850
        %v1165 = vpop.f32.mrf.mxu0
        %v1166 = vadd.f32 0.0, %v1165
        %v1167 = vpop.f32.mrf.mxu0
        %v1168 = vadd.f32 0.0, %v1167
        %1169 = vmatmul.bf16.gmra.mxu0 %v852
        %v1170 = vpop.f32.mrf.mxu0
        %v1171 = vadd.f32 0.0, %v1170
        %v1172 = vpop.f32.mrf.mxu0
        %v1173 = vadd.f32 0.0, %v1172
        %1174 = vmatmul.bf16.gmra.mxu0 %v854
        %v1175 = vpop.f32.mrf.mxu0
        %v1176 = vadd.f32 0.0, %v1175
        %v1177 = vpop.f32.mrf.mxu0
        %v1178 = vadd.f32 0.0, %v1177
        %1179 = vmatmul.bf16.gmra.mxu0 %v856
        %v1180 = vpop.f32.mrf.mxu0
        %v1181 = vadd.f32 0.0, %v1180
        %v1182 = vpop.f32.mrf.mxu0
        %v1183 = vadd.f32 0.0, %v1182
        %1184 = vmatmul.bf16.gmra.mxu0 %v858
        %v1185 = vpop.f32.mrf.mxu0
        %v1186 = vadd.f32 0.0, %v1185
        %v1187 = vpop.f32.mrf.mxu0
        %v1188 = vadd.f32 0.0, %v1187
        %1189 = vmatmul.bf16.gmra.mxu0 %v860
        %v1190 = vpop.f32.mrf.mxu0
        %v1191 = vadd.f32 0.0, %v1190
        %v1192 = vpop.f32.mrf.mxu0
        %v1193 = vadd.f32 0.0, %v1192
        %1194 = vmatmul.bf16.gmra.mxu0 %v862
        %v1195 = vpop.f32.mrf.mxu0
        %v1196 = vadd.f32 0.0, %v1195
        %v1197 = vpop.f32.mrf.mxu0
        %v1198 = vadd.f32 0.0, %v1197
        %1199 = vmatmul.bf16.gmra.mxu0 %v864
        %v1200 = vpop.f32.mrf.mxu0
        %v1201 = vadd.f32 0.0, %v1200
        %v1202 = vpop.f32.mrf.mxu0
        %v1203 = vadd.f32 0.0, %v1202
        %1204 = vmatmul.bf16.gmra.mxu0 %v866
        %v1205 = vpop.f32.mrf.mxu0
        %v1206 = vadd.f32 0.0, %v1205
        %v1207 = vpop.f32.mrf.mxu0
        %v1208 = vadd.f32 0.0, %v1207
        %1209 = vmatmul.bf16.gmra.mxu0 %v868
        %v1210 = vpop.f32.mrf.mxu0
        %v1211 = vadd.f32 0.0, %v1210
        %v1212 = vpop.f32.mrf.mxu0
        %v1213 = vadd.f32 0.0, %v1212
        %1214 = vmatmul.bf16.gmra.mxu0 %v870
        %v1215 = vpop.f32.mrf.mxu0
        %v1216 = vadd.f32 0.0, %v1215
        %v1217 = vpop.f32.mrf.mxu0
        %v1218 = vadd.f32 0.0, %v1217
        %1219 = vmatmul.bf16.gmra.mxu0 %v872
        %v1220 = vpop.f32.mrf.mxu0
        %v1221 = vadd.f32 0.0, %v1220
        %v1222 = vpop.f32.mrf.mxu0
        %v1223 = vadd.f32 0.0, %v1222
        %1224 = vmatmul.bf16.gmra.mxu0 %v874
        %v1225 = vpop.f32.mrf.mxu0
        %v1226 = vadd.f32 0.0, %v1225
        %v1227 = vpop.f32.mrf.mxu0
        %v1228 = vadd.f32 0.0, %v1227
        %1229 = vmatmul.bf16.gmra.mxu0 %v876
        %v1230 = vpop.f32.mrf.mxu0
        %v1231 = vadd.f32 0.0, %v1230
        %v1232 = vpop.f32.mrf.mxu0
        %v1233 = vadd.f32 0.0, %v1232
        %1234 = vmatmul.bf16.gmra.mxu0 %v878
        %v1235 = vpop.f32.mrf.mxu0
        %v1236 = vadd.f32 0.0, %v1235
        %v1237 = vpop.f32.mrf.mxu0
        %v1238 = vadd.f32 0.0, %v1237
        %1239 = vmatmul.bf16.gmra.mxu0 %v880
        %v1240 = vpop.f32.mrf.mxu0
        %v1241 = vadd.f32 0.0, %v1240
        %v1242 = vpop.f32.mrf.mxu0
        %v1243 = vadd.f32 0.0, %v1242
        %1244 = vmatmul.bf16.gmra.mxu0 %v882
        %v1245 = vpop.f32.mrf.mxu0
        %v1246 = vadd.f32 0.0, %v1245
        %v1247 = vpop.f32.mrf.mxu0
        %v1248 = vadd.f32 0.0, %v1247
        %1249 = vmatmul.bf16.gmra.mxu0 %v884
        %v1250 = vpop.f32.mrf.mxu0
        %v1251 = vadd.f32 0.0, %v1250
        %v1252 = vpop.f32.mrf.mxu0
        %v1253 = vadd.f32 0.0, %v1252
        %1254 = vmatmul.bf16.gmra.mxu0 %v886
        %v1255 = vpop.f32.mrf.mxu0
        %v1256 = vadd.f32 0.0, %v1255
        %v1257 = vpop.f32.mrf.mxu0
        %v1258 = vadd.f32 0.0, %v1257
        %1259 = vmatmul.bf16.gmra.mxu0 %v888
        %v1260 = vpop.f32.mrf.mxu0
        %v1261 = vadd.f32 0.0, %v1260
        %v1262 = vpop.f32.mrf.mxu0
        %v1263 = vadd.f32 0.0, %v1262
        %1264 = vmatmul.bf16.gmra.mxu0 %v890
        %v1265 = vpop.f32.mrf.mxu0
        %v1266 = vadd.f32 0.0, %v1265
        %v1267 = vpop.f32.mrf.mxu0
        %v1268 = vadd.f32 0.0, %v1267
        %1269 = vmatmul.bf16.gmra.mxu0 %v892
        %v1270 = vpop.f32.mrf.mxu0
        %v1271 = vadd.f32 0.0, %v1270
        %v1272 = vpop.f32.mrf.mxu0
        %v1273 = vadd.f32 0.0, %v1272
        %1274 = vmatmul.bf16.gmra.mxu0 %v894
        %v1275 = vpop.f32.mrf.mxu0
        %v1276 = vadd.f32 0.0, %v1275
        %v1277 = vpop.f32.mrf.mxu0
        %v1278 = vadd.f32 0.0, %v1277
        %1279 = vmatmul.bf16.gmra.mxu0 %v896
        %v1280 = vpop.f32.mrf.mxu0
        %v1281 = vadd.f32 0.0, %v1280
        %v1282 = vpop.f32.mrf.mxu0
        %v1283 = vadd.f32 0.0, %v1282
        %1284 = vmatmul.bf16.gmra.mxu0 %v898
        %v1285 = vpop.f32.mrf.mxu0
        %v1286 = vadd.f32 0.0, %v1285
        %v1287 = vpop.f32.mrf.mxu0
        %v1288 = vadd.f32 0.0, %v1287
        %1289 = vmatmul.bf16.gmra.mxu0 %v900
        %v1290 = vpop.f32.mrf.mxu0
        %v1291 = vadd.f32 0.0, %v1290
        %v1292 = vpop.f32.mrf.mxu0
        %v1293 = vadd.f32 0.0, %v1292
        %1294 = vdwg.mxu0
        %1295 = vmatpush.bf16.msra.mxu0 %v1092
        %1296 = vmatpush.bf16.msra.mxu0 %v1090
        %1297 = vmatpush.bf16.msra.mxu0 %v1088
        %1298 = vmatpush.bf16.msra.mxu0 %v1086
        %1299 = vmatpush.bf16.msra.mxu0 %v1084
        %1300 = vmatpush.bf16.msra.mxu0 %v1082
        %1301 = vmatpush.bf16.msra.mxu0 %v1080
        %1302 = vmatpush.bf16.msra.mxu0 %v1078
        %1303 = vmatmul.bf16.gmra.mxu0 %v839
        %v1304 = vpop.f32.mrf.mxu0
        %v1305 = vadd.f32 %v1136, %v1304
        %v1306 = vpop.f32.mrf.mxu0
        %v1307 = vadd.f32 %v1138, %v1306
        %1308 = vmatmul.bf16.gmra.mxu0 %v841
        %v1309 = vpop.f32.mrf.mxu0
        %v1310 = vadd.f32 %v1141, %v1309
        %v1311 = vpop.f32.mrf.mxu0
        %v1312 = vadd.f32 %v1143, %v1311
        %1313 = vmatmul.bf16.gmra.mxu0 %v843
        %v1314 = vpop.f32.mrf.mxu0
        %v1315 = vadd.f32 %v1146, %v1314
        %v1316 = vpop.f32.mrf.mxu0
        %v1317 = vadd.f32 %v1148, %v1316
        %1318 = vmatmul.bf16.gmra.mxu0 %v845
        %v1319 = vpop.f32.mrf.mxu0
        %v1320 = vadd.f32 %v1151, %v1319
        %v1321 = vpop.f32.mrf.mxu0
        %v1322 = vadd.f32 %v1153, %v1321
        %1323 = vmatmul.bf16.gmra.mxu0 %v847
        %v1324 = vpop.f32.mrf.mxu0
        %v1325 = vadd.f32 %v1156, %v1324
        %v1326 = vpop.f32.mrf.mxu0
        %v1327 = vadd.f32 %v1158, %v1326
        %1328 = vmatmul.bf16.gmra.mxu0 %v849
        %v1329 = vpop.f32.mrf.mxu0
        %v1330 = vadd.f32 %v1161, %v1329
        %v1331 = vpop.f32.mrf.mxu0
        %v1332 = vadd.f32 %v1163, %v1331
        %1333 = vmatmul.bf16.gmra.mxu0 %v851
        %v1334 = vpop.f32.mrf.mxu0
        %v1335 = vadd.f32 %v1166, %v1334
        %v1336 = vpop.f32.mrf.mxu0
        %v1337 = vadd.f32 %v1168, %v1336
        %1338 = vmatmul.bf16.gmra.mxu0 %v853
        %v1339 = vpop.f32.mrf.mxu0
        %v1340 = vadd.f32 %v1171, %v1339
        %v1341 = vpop.f32.mrf.mxu0
        %v1342 = vadd.f32 %v1173, %v1341
        %1343 = vmatmul.bf16.gmra.mxu0 %v855
        %v1344 = vpop.f32.mrf.mxu0
        %v1345 = vadd.f32 %v1176, %v1344
        %v1346 = vpop.f32.mrf.mxu0
        %v1347 = vadd.f32 %v1178, %v1346
        %1348 = vmatmul.bf16.gmra.mxu0 %v857
        %v1349 = vpop.f32.mrf.mxu0
        %v1350 = vadd.f32 %v1181, %v1349
        %v1351 = vpop.f32.mrf.mxu0
        %v1352 = vadd.f32 %v1183, %v1351
        %1353 = vmatmul.bf16.gmra.mxu0 %v859
        %v1354 = vpop.f32.mrf.mxu0
        %v1355 = vadd.f32 %v1186, %v1354
        %v1356 = vpop.f32.mrf.mxu0
        %v1357 = vadd.f32 %v1188, %v1356
        %1358 = vmatmul.bf16.gmra.mxu0 %v861
        %v1359 = vpop.f32.mrf.mxu0
        %v1360 = vadd.f32 %v1191, %v1359
        %v1361 = vpop.f32.mrf.mxu0
        %v1362 = vadd.f32 %v1193, %v1361
        %1363 = vmatmul.bf16.gmra.mxu0 %v863
        %v1364 = vpop.f32.mrf.mxu0
        %v1365 = vadd.f32 %v1196, %v1364
        %v1366 = vpop.f32.mrf.mxu0
        %v1367 = vadd.f32 %v1198, %v1366
        %1368 = vmatmul.bf16.gmra.mxu0 %v865
        %v1369 = vpop.f32.mrf.mxu0
        %v1370 = vadd.f32 %v1201, %v1369
        %v1371 = vpop.f32.mrf.mxu0
        %v1372 = vadd.f32 %v1203, %v1371
        %1373 = vmatmul.bf16.gmra.mxu0 %v867
        %v1374 = vpop.f32.mrf.mxu0
        %v1375 = vadd.f32 %v1206, %v1374
        %v1376 = vpop.f32.mrf.mxu0
        %v1377 = vadd.f32 %v1208, %v1376
        %1378 = vmatmul.bf16.gmra.mxu0 %v869
        %v1379 = vpop.f32.mrf.mxu0
        %v1380 = vadd.f32 %v1211, %v1379
        %v1381 = vpop.f32.mrf.mxu0
        %v1382 = vadd.f32 %v1213, %v1381
        %1383 = vmatmul.bf16.gmra.mxu0 %v871
        %v1384 = vpop.f32.mrf.mxu0
        %v1385 = vadd.f32 %v1216, %v1384
        %v1386 = vpop.f32.mrf.mxu0
        %v1387 = vadd.f32 %v1218, %v1386
        %1388 = vmatmul.bf16.gmra.mxu0 %v873
        %v1389 = vpop.f32.mrf.mxu0
        %v1390 = vadd.f32 %v1221, %v1389
        %v1391 = vpop.f32.mrf.mxu0
        %v1392 = vadd.f32 %v1223, %v1391
        %1393 = vmatmul.bf16.gmra.mxu0 %v875
        %v1394 = vpop.f32.mrf.mxu0
        %v1395 = vadd.f32 %v1226, %v1394
        %v1396 = vpop.f32.mrf.mxu0
        %v1397 = vadd.f32 %v1228, %v1396
        %1398 = vmatmul.bf16.gmra.mxu0 %v877
        %v1399 = vpop.f32.mrf.mxu0
        %v1400 = vadd.f32 %v1231, %v1399
        %v1401 = vpop.f32.mrf.mxu0
        %v1402 = vadd.f32 %v1233, %v1401
        %1403 = vmatmul.bf16.gmra.mxu0 %v879
        %v1404 = vpop.f32.mrf.mxu0
        %v1405 = vadd.f32 %v1236, %v1404
        %v1406 = vpop.f32.mrf.mxu0
        %v1407 = vadd.f32 %v1238, %v1406
        %1408 = vmatmul.bf16.gmra.mxu0 %v881
        %v1409 = vpop.f32.mrf.mxu0
        %v1410 = vadd.f32 %v1241, %v1409
        %v1411 = vpop.f32.mrf.mxu0
        %v1412 = vadd.f32 %v1243, %v1411
        %1413 = vmatmul.bf16.gmra.mxu0 %v883
        %v1414 = vpop.f32.mrf.mxu0
        %v1415 = vadd.f32 %v1246, %v1414
        %v1416 = vpop.f32.mrf.mxu0
        %v1417 = vadd.f32 %v1248, %v1416
        %1418 = vmatmul.bf16.gmra.mxu0 %v885
        %v1419 = vpop.f32.mrf.mxu0
        %v1420 = vadd.f32 %v1251, %v1419
        %v1421 = vpop.f32.mrf.mxu0
        %v1422 = vadd.f32 %v1253, %v1421
        %1423 = vmatmul.bf16.gmra.mxu0 %v887
        %v1424 = vpop.f32.mrf.mxu0
        %v1425 = vadd.f32 %v1256, %v1424
        %v1426 = vpop.f32.mrf.mxu0
        %v1427 = vadd.f32 %v1258, %v1426
        %1428 = vmatmul.bf16.gmra.mxu0 %v889
        %v1429 = vpop.f32.mrf.mxu0
        %v1430 = vadd.f32 %v1261, %v1429
        %v1431 = vpop.f32.mrf.mxu0
        %v1432 = vadd.f32 %v1263, %v1431
        %1433 = vmatmul.bf16.gmra.mxu0 %v891
        %v1434 = vpop.f32.mrf.mxu0
        %v1435 = vadd.f32 %v1266, %v1434
        %v1436 = vpop.f32.mrf.mxu0
        %v1437 = vadd.f32 %v1268, %v1436
        %1438 = vmatmul.bf16.gmra.mxu0 %v893
        %v1439 = vpop.f32.mrf.mxu0
        %v1440 = vadd.f32 %v1271, %v1439
        %v1441 = vpop.f32.mrf.mxu0
        %v1442 = vadd.f32 %v1273, %v1441
        %1443 = vmatmul.bf16.gmra.mxu0 %v895
        %v1444 = vpop.f32.mrf.mxu0
        %v1445 = vadd.f32 %v1276, %v1444
        %v1446 = vpop.f32.mrf.mxu0
        %v1447 = vadd.f32 %v1278, %v1446
        %1448 = vmatmul.bf16.gmra.mxu0 %v897
        %v1449 = vpop.f32.mrf.mxu0
        %v1450 = vadd.f32 %v1281, %v1449
        %v1451 = vpop.f32.mrf.mxu0
        %v1452 = vadd.f32 %v1283, %v1451
        %1453 = vmatmul.bf16.gmra.mxu0 %v899
        %v1454 = vpop.f32.mrf.mxu0
        %v1455 = vadd.f32 %v1286, %v1454
        %v1456 = vpop.f32.mrf.mxu0
        %v1457 = vadd.f32 %v1288, %v1456
        %1458 = vmatmul.bf16.gmra.mxu0 %v901
        %v1459 = vpop.f32.mrf.mxu0
        %v1460 = vadd.f32 %v1291, %v1459
        %v1461 = vpop.f32.mrf.mxu0
        %v1462 = vadd.f32 %v1293, %v1461
        %1463 = vdwg.mxu0
        %1464 = vmatpush.bf16.msra.mxu0 %v1077
        %1465 = vmatpush.bf16.msra.mxu0 %v1075
        %1466 = vmatpush.bf16.msra.mxu0 %v1073
        %1467 = vmatpush.bf16.msra.mxu0 %v1071
        %1468 = vmatpush.bf16.msra.mxu0 %v1069
        %1469 = vmatpush.bf16.msra.mxu0 %v1067
        %1470 = vmatpush.bf16.msra.mxu0 %v1065
        %1471 = vmatpush.bf16.msra.mxu0 %v1063
        %1472 = vmatmul.bf16.gmra.mxu0 %v838
        %v1473 = vpop.f32.mrf.mxu0
        %v1474 = vadd.f32 0.0, %v1473
        %v1475 = vpop.f32.mrf.mxu0
        %v1476 = vadd.f32 0.0, %v1475
        %1477 = vmatmul.bf16.gmra.mxu0 %v840
        %v1478 = vpop.f32.mrf.mxu0
        %v1479 = vadd.f32 0.0, %v1478
        %v1480 = vpop.f32.mrf.mxu0
        %v1481 = vadd.f32 0.0, %v1480
        %1482 = vmatmul.bf16.gmra.mxu0 %v842
        %v1483 = vpop.f32.mrf.mxu0
        %v1484 = vadd.f32 0.0, %v1483
        %v1485 = vpop.f32.mrf.mxu0
        %v1486 = vadd.f32 0.0, %v1485
        %1487 = vmatmul.bf16.gmra.mxu0 %v844
        %v1488 = vpop.f32.mrf.mxu0
        %v1489 = vadd.f32 0.0, %v1488
        %v1490 = vpop.f32.mrf.mxu0
        %v1491 = vadd.f32 0.0, %v1490
        %1492 = vmatmul.bf16.gmra.mxu0 %v846
        %v1493 = vpop.f32.mrf.mxu0
        %v1494 = vadd.f32 0.0, %v1493
        %v1495 = vpop.f32.mrf.mxu0
        %v1496 = vadd.f32 0.0, %v1495
        %1497 = vmatmul.bf16.gmra.mxu0 %v848
        %v1498 = vpop.f32.mrf.mxu0
        %v1499 = vadd.f32 0.0, %v1498
        %v1500 = vpop.f32.mrf.mxu0
        %v1501 = vadd.f32 0.0, %v1500
        %1502 = vmatmul.bf16.gmra.mxu0 %v850
        %v1503 = vpop.f32.mrf.mxu0
        %v1504 = vadd.f32 0.0, %v1503
        %v1505 = vpop.f32.mrf.mxu0
        %v1506 = vadd.f32 0.0, %v1505
        %1507 = vmatmul.bf16.gmra.mxu0 %v852
        %v1508 = vpop.f32.mrf.mxu0
        %v1509 = vadd.f32 0.0, %v1508
        %v1510 = vpop.f32.mrf.mxu0
        %v1511 = vadd.f32 0.0, %v1510
        %1512 = vmatmul.bf16.gmra.mxu0 %v854
        %v1513 = vpop.f32.mrf.mxu0
        %v1514 = vadd.f32 0.0, %v1513
        %v1515 = vpop.f32.mrf.mxu0
        %v1516 = vadd.f32 0.0, %v1515
        %1517 = vmatmul.bf16.gmra.mxu0 %v856
        %v1518 = vpop.f32.mrf.mxu0
        %v1519 = vadd.f32 0.0, %v1518
        %v1520 = vpop.f32.mrf.mxu0
        %v1521 = vadd.f32 0.0, %v1520
        %1522 = vmatmul.bf16.gmra.mxu0 %v858
        %v1523 = vpop.f32.mrf.mxu0
        %v1524 = vadd.f32 0.0, %v1523
        %v1525 = vpop.f32.mrf.mxu0
        %v1526 = vadd.f32 0.0, %v1525
        %1527 = vmatmul.bf16.gmra.mxu0 %v860
        %v1528 = vpop.f32.mrf.mxu0
        %v1529 = vadd.f32 0.0, %v1528
        %v1530 = vpop.f32.mrf.mxu0
        %v1531 = vadd.f32 0.0, %v1530
        %1532 = vmatmul.bf16.gmra.mxu0 %v862
        %v1533 = vpop.f32.mrf.mxu0
        %v1534 = vadd.f32 0.0, %v1533
        %v1535 = vpop.f32.mrf.mxu0
        %v1536 = vadd.f32 0.0, %v1535
        %1537 = vmatmul.bf16.gmra.mxu0 %v864
        %v1538 = vpop.f32.mrf.mxu0
        %v1539 = vadd.f32 0.0, %v1538
        %v1540 = vpop.f32.mrf.mxu0
        %v1541 = vadd.f32 0.0, %v1540
        %1542 = vmatmul.bf16.gmra.mxu0 %v866
        %v1543 = vpop.f32.mrf.mxu0
        %v1544 = vadd.f32 0.0, %v1543
        %v1545 = vpop.f32.mrf.mxu0
        %v1546 = vadd.f32 0.0, %v1545
        %1547 = vmatmul.bf16.gmra.mxu0 %v868
        %v1548 = vpop.f32.mrf.mxu0
        %v1549 = vadd.f32 0.0, %v1548
        %v1550 = vpop.f32.mrf.mxu0
        %v1551 = vadd.f32 0.0, %v1550
        %1552 = vmatmul.bf16.gmra.mxu0 %v870
        %v1553 = vpop.f32.mrf.mxu0
        %v1554 = vadd.f32 0.0, %v1553
        %v1555 = vpop.f32.mrf.mxu0
        %v1556 = vadd.f32 0.0, %v1555
        %1557 = vmatmul.bf16.gmra.mxu0 %v872
        %v1558 = vpop.f32.mrf.mxu0
        %v1559 = vadd.f32 0.0, %v1558
        %v1560 = vpop.f32.mrf.mxu0
        %v1561 = vadd.f32 0.0, %v1560
        %1562 = vmatmul.bf16.gmra.mxu0 %v874
        %v1563 = vpop.f32.mrf.mxu0
        %v1564 = vadd.f32 0.0, %v1563
        %v1565 = vpop.f32.mrf.mxu0
        %v1566 = vadd.f32 0.0, %v1565
        %1567 = vmatmul.bf16.gmra.mxu0 %v876
        %v1568 = vpop.f32.mrf.mxu0
        %v1569 = vadd.f32 0.0, %v1568
        %v1570 = vpop.f32.mrf.mxu0
        %v1571 = vadd.f32 0.0, %v1570
        %1572 = vmatmul.bf16.gmra.mxu0 %v878
        %v1573 = vpop.f32.mrf.mxu0
        %v1574 = vadd.f32 0.0, %v1573
        %v1575 = vpop.f32.mrf.mxu0
        %v1576 = vadd.f32 0.0, %v1575
        %1577 = vmatmul.bf16.gmra.mxu0 %v880
        %v1578 = vpop.f32.mrf.mxu0
        %v1579 = vadd.f32 0.0, %v1578
        %v1580 = vpop.f32.mrf.mxu0
        %v1581 = vadd.f32 0.0, %v1580
        %1582 = vmatmul.bf16.gmra.mxu0 %v882
        %v1583 = vpop.f32.mrf.mxu0
        %v1584 = vadd.f32 0.0, %v1583
        %v1585 = vpop.f32.mrf.mxu0
        %v1586 = vadd.f32 0.0, %v1585
        %1587 = vmatmul.bf16.gmra.mxu0 %v884
        %v1588 = vpop.f32.mrf.mxu0
        %v1589 = vadd.f32 0.0, %v1588
        %v1590 = vpop.f32.mrf.mxu0
        %v1591 = vadd.f32 0.0, %v1590
        %1592 = vmatmul.bf16.gmra.mxu0 %v886
        %v1593 = vpop.f32.mrf.mxu0
        %v1594 = vadd.f32 0.0, %v1593
        %v1595 = vpop.f32.mrf.mxu0
        %v1596 = vadd.f32 0.0, %v1595
        %1597 = vmatmul.bf16.gmra.mxu0 %v888
        %v1598 = vpop.f32.mrf.mxu0
        %v1599 = vadd.f32 0.0, %v1598
        %v1600 = vpop.f32.mrf.mxu0
        %v1601 = vadd.f32 0.0, %v1600
        %1602 = vmatmul.bf16.gmra.mxu0 %v890
        %v1603 = vpop.f32.mrf.mxu0
        %v1604 = vadd.f32 0.0, %v1603
        %v1605 = vpop.f32.mrf.mxu0
        %v1606 = vadd.f32 0.0, %v1605
        %1607 = vmatmul.bf16.gmra.mxu0 %v892
        %v1608 = vpop.f32.mrf.mxu0
        %v1609 = vadd.f32 0.0, %v1608
        %v1610 = vpop.f32.mrf.mxu0
        %v1611 = vadd.f32 0.0, %v1610
        %1612 = vmatmul.bf16.gmra.mxu0 %v894
        %v1613 = vpop.f32.mrf.mxu0
        %v1614 = vadd.f32 0.0, %v1613
        %v1615 = vpop.f32.mrf.mxu0
        %v1616 = vadd.f32 0.0, %v1615
        %1617 = vmatmul.bf16.gmra.mxu0 %v896
        %v1618 = vpop.f32.mrf.mxu0
        %v1619 = vadd.f32 0.0, %v1618
        %v1620 = vpop.f32.mrf.mxu0
        %v1621 = vadd.f32 0.0, %v1620
        %1622 = vmatmul.bf16.gmra.mxu0 %v898
        %v1623 = vpop.f32.mrf.mxu0
        %v1624 = vadd.f32 0.0, %v1623
        %v1625 = vpop.f32.mrf.mxu0
        %v1626 = vadd.f32 0.0, %v1625
        %1627 = vmatmul.bf16.gmra.mxu0 %v900
        %v1628 = vpop.f32.mrf.mxu0
        %v1629 = vadd.f32 0.0, %v1628
        %v1630 = vpop.f32.mrf.mxu0
        %v1631 = vadd.f32 0.0, %v1630
        %1632 = vdwg.mxu0
        %1633 = vmatpush.bf16.msra.mxu0 %v1093
        %1634 = vmatpush.bf16.msra.mxu0 %v1091
        %1635 = vmatpush.bf16.msra.mxu0 %v1089
        %1636 = vmatpush.bf16.msra.mxu0 %v1087
        %1637 = vmatpush.bf16.msra.mxu0 %v1085
        %1638 = vmatpush.bf16.msra.mxu0 %v1083
        %1639 = vmatpush.bf16.msra.mxu0 %v1081
        %1640 = vmatpush.bf16.msra.mxu0 %v1079
        %1641 = vmatmul.bf16.gmra.mxu0 %v839
        %v1642 = vpop.f32.mrf.mxu0
        %v1643 = vadd.f32 %v1474, %v1642
        %v1644 = vpop.f32.mrf.mxu0
        %v1645 = vadd.f32 %v1476, %v1644
        %1646 = vmatmul.bf16.gmra.mxu0 %v841
        %v1647 = vpop.f32.mrf.mxu0
        %v1648 = vadd.f32 %v1479, %v1647
        %v1649 = vpop.f32.mrf.mxu0
        %v1650 = vadd.f32 %v1481, %v1649
        %1651 = vmatmul.bf16.gmra.mxu0 %v843
        %v1652 = vpop.f32.mrf.mxu0
        %v1653 = vadd.f32 %v1484, %v1652
        %v1654 = vpop.f32.mrf.mxu0
        %v1655 = vadd.f32 %v1486, %v1654
        %1656 = vmatmul.bf16.gmra.mxu0 %v845
        %v1657 = vpop.f32.mrf.mxu0
        %v1658 = vadd.f32 %v1489, %v1657
        %v1659 = vpop.f32.mrf.mxu0
        %v1660 = vadd.f32 %v1491, %v1659
        %1661 = vmatmul.bf16.gmra.mxu0 %v847
        %v1662 = vpop.f32.mrf.mxu0
        %v1663 = vadd.f32 %v1494, %v1662
        %v1664 = vpop.f32.mrf.mxu0
        %v1665 = vadd.f32 %v1496, %v1664
        %1666 = vmatmul.bf16.gmra.mxu0 %v849
        %v1667 = vpop.f32.mrf.mxu0
        %v1668 = vadd.f32 %v1499, %v1667
        %v1669 = vpop.f32.mrf.mxu0
        %v1670 = vadd.f32 %v1501, %v1669
        %1671 = vmatmul.bf16.gmra.mxu0 %v851
        %v1672 = vpop.f32.mrf.mxu0
        %v1673 = vadd.f32 %v1504, %v1672
        %v1674 = vpop.f32.mrf.mxu0
        %v1675 = vadd.f32 %v1506, %v1674
        %1676 = vmatmul.bf16.gmra.mxu0 %v853
        %v1677 = vpop.f32.mrf.mxu0
        %v1678 = vadd.f32 %v1509, %v1677
        %v1679 = vpop.f32.mrf.mxu0
        %v1680 = vadd.f32 %v1511, %v1679
        %1681 = vmatmul.bf16.gmra.mxu0 %v855
        %v1682 = vpop.f32.mrf.mxu0
        %v1683 = vadd.f32 %v1514, %v1682
        %v1684 = vpop.f32.mrf.mxu0
        %v1685 = vadd.f32 %v1516, %v1684
        %1686 = vmatmul.bf16.gmra.mxu0 %v857
        %v1687 = vpop.f32.mrf.mxu0
        %v1688 = vadd.f32 %v1519, %v1687
        %v1689 = vpop.f32.mrf.mxu0
        %v1690 = vadd.f32 %v1521, %v1689
        %1691 = vmatmul.bf16.gmra.mxu0 %v859
        %v1692 = vpop.f32.mrf.mxu0
        %v1693 = vadd.f32 %v1524, %v1692
        %v1694 = vpop.f32.mrf.mxu0
        %v1695 = vadd.f32 %v1526, %v1694
        %1696 = vmatmul.bf16.gmra.mxu0 %v861
        %v1697 = vpop.f32.mrf.mxu0
        %v1698 = vadd.f32 %v1529, %v1697
        %v1699 = vpop.f32.mrf.mxu0
        %v1700 = vadd.f32 %v1531, %v1699
        %1701 = vmatmul.bf16.gmra.mxu0 %v863
        %v1702 = vpop.f32.mrf.mxu0
        %v1703 = vadd.f32 %v1534, %v1702
        %v1704 = vpop.f32.mrf.mxu0
        %v1705 = vadd.f32 %v1536, %v1704
        %1706 = vmatmul.bf16.gmra.mxu0 %v865
        %v1707 = vpop.f32.mrf.mxu0
        %v1708 = vadd.f32 %v1539, %v1707
        %v1709 = vpop.f32.mrf.mxu0
        %v1710 = vadd.f32 %v1541, %v1709
        %1711 = vmatmul.bf16.gmra.mxu0 %v867
        %v1712 = vpop.f32.mrf.mxu0
        %v1713 = vadd.f32 %v1544, %v1712
        %v1714 = vpop.f32.mrf.mxu0
        %v1715 = vadd.f32 %v1546, %v1714
        %1716 = vmatmul.bf16.gmra.mxu0 %v869
        %v1717 = vpop.f32.mrf.mxu0
        %v1718 = vadd.f32 %v1549, %v1717
        %v1719 = vpop.f32.mrf.mxu0
        %v1720 = vadd.f32 %v1551, %v1719
        %1721 = vmatmul.bf16.gmra.mxu0 %v871
        %v1722 = vpop.f32.mrf.mxu0
        %v1723 = vadd.f32 %v1554, %v1722
        %v1724 = vpop.f32.mrf.mxu0
        %v1725 = vadd.f32 %v1556, %v1724
        %1726 = vmatmul.bf16.gmra.mxu0 %v873
        %v1727 = vpop.f32.mrf.mxu0
        %v1728 = vadd.f32 %v1559, %v1727
        %v1729 = vpop.f32.mrf.mxu0
        %v1730 = vadd.f32 %v1561, %v1729
        %1731 = vmatmul.bf16.gmra.mxu0 %v875
        %v1732 = vpop.f32.mrf.mxu0
        %v1733 = vadd.f32 %v1564, %v1732
        %v1734 = vpop.f32.mrf.mxu0
        %v1735 = vadd.f32 %v1566, %v1734
        %1736 = vmatmul.bf16.gmra.mxu0 %v877
        %v1737 = vpop.f32.mrf.mxu0
        %v1738 = vadd.f32 %v1569, %v1737
        %v1739 = vpop.f32.mrf.mxu0
        %v1740 = vadd.f32 %v1571, %v1739
        %1741 = vmatmul.bf16.gmra.mxu0 %v879
        %v1742 = vpop.f32.mrf.mxu0
        %v1743 = vadd.f32 %v1574, %v1742
        %v1744 = vpop.f32.mrf.mxu0
        %v1745 = vadd.f32 %v1576, %v1744
        %1746 = vmatmul.bf16.gmra.mxu0 %v881
        %v1747 = vpop.f32.mrf.mxu0
        %v1748 = vadd.f32 %v1579, %v1747
        %v1749 = vpop.f32.mrf.mxu0
        %v1750 = vadd.f32 %v1581, %v1749
        %1751 = vmatmul.bf16.gmra.mxu0 %v883
        %v1752 = vpop.f32.mrf.mxu0
        %v1753 = vadd.f32 %v1584, %v1752
        %v1754 = vpop.f32.mrf.mxu0
        %v1755 = vadd.f32 %v1586, %v1754
        %1756 = vmatmul.bf16.gmra.mxu0 %v885
        %v1757 = vpop.f32.mrf.mxu0
        %v1758 = vadd.f32 %v1589, %v1757
        %v1759 = vpop.f32.mrf.mxu0
        %v1760 = vadd.f32 %v1591, %v1759
        %1761 = vmatmul.bf16.gmra.mxu0 %v887
        %v1762 = vpop.f32.mrf.mxu0
        %v1763 = vadd.f32 %v1594, %v1762
        %v1764 = vpop.f32.mrf.mxu0
        %v1765 = vadd.f32 %v1596, %v1764
        %1766 = vmatmul.bf16.gmra.mxu0 %v889
        %v1767 = vpop.f32.mrf.mxu0
        %v1768 = vadd.f32 %v1599, %v1767
        %v1769 = vpop.f32.mrf.mxu0
        %v1770 = vadd.f32 %v1601, %v1769
        %1771 = vmatmul.bf16.gmra.mxu0 %v891
        %v1772 = vpop.f32.mrf.mxu0
        %v1773 = vadd.f32 %v1604, %v1772
        %v1774 = vpop.f32.mrf.mxu0
        %v1775 = vadd.f32 %v1606, %v1774
        %1776 = vmatmul.bf16.gmra.mxu0 %v893
        %v1777 = vpop.f32.mrf.mxu0
        %v1778 = vadd.f32 %v1609, %v1777
        %v1779 = vpop.f32.mrf.mxu0
        %v1780 = vadd.f32 %v1611, %v1779
        %1781 = vmatmul.bf16.gmra.mxu0 %v895
        %v1782 = vpop.f32.mrf.mxu0
        %v1783 = vadd.f32 %v1614, %v1782
        %v1784 = vpop.f32.mrf.mxu0
        %v1785 = vadd.f32 %v1616, %v1784
        %1786 = vmatmul.bf16.gmra.mxu0 %v897
        %v1787 = vpop.f32.mrf.mxu0
        %v1788 = vadd.f32 %v1619, %v1787
        %v1789 = vpop.f32.mrf.mxu0
        %v1790 = vadd.f32 %v1621, %v1789
        %1791 = vmatmul.bf16.gmra.mxu0 %v899
        %v1792 = vpop.f32.mrf.mxu0
        %v1793 = vadd.f32 %v1624, %v1792
        %v1794 = vpop.f32.mrf.mxu0
        %v1795 = vadd.f32 %v1626, %v1794
        %1796 = vmatmul.bf16.gmra.mxu0 %v901
        %v1797 = vpop.f32.mrf.mxu0
        %v1798 = vadd.f32 %v1629, %v1797
        %v1799 = vpop.f32.mrf.mxu0
        %v1800 = vadd.f32 %v1631, %v1799
        %1801 = vdwg.mxu0
        %v1802 = vadd.f32 %v422, %v1305
        %v1803 = vadd.f32 %v423, %v1643
        %v1804 = vadd.f32 %v424, %v1307
        %v1805 = vadd.f32 %v425, %v1645
        %v1806 = vadd.f32 %v426, %v1310
        %v1807 = vadd.f32 %v427, %v1648
        %v1808 = vadd.f32 %v428, %v1312
        %v1809 = vadd.f32 %v429, %v1650
        %v1810 = vadd.f32 %v430, %v1315
        %v1811 = vadd.f32 %v431, %v1653
        %v1812 = vadd.f32 %v432, %v1317
        %v1813 = vadd.f32 %v433, %v1655
        %v1814 = vadd.f32 %v434, %v1320
        %v1815 = vadd.f32 %v435, %v1658
        %v1816 = vadd.f32 %v436, %v1322
        %v1817 = vadd.f32 %v437, %v1660
        %v1818 = vadd.f32 %v438, %v1325
        %v1819 = vadd.f32 %v439, %v1663
        %v1820 = vadd.f32 %v440, %v1327
        %v1821 = vadd.f32 %v441, %v1665
        %v1822 = vadd.f32 %v442, %v1330
        %v1823 = vadd.f32 %v443, %v1668
        %v1824 = vadd.f32 %v444, %v1332
        %v1825 = vadd.f32 %v445, %v1670
        %v1826 = vadd.f32 %v446, %v1335
        %v1827 = vadd.f32 %v447, %v1673
        %v1828 = vadd.f32 %v448, %v1337
        %v1829 = vadd.f32 %v449, %v1675
        %v1830 = vadd.f32 %v450, %v1340
        %v1831 = vadd.f32 %v451, %v1678
        %v1832 = vadd.f32 %v452, %v1342
        %v1833 = vadd.f32 %v453, %v1680
        %v1834 = vadd.f32 %v454, %v1345
        %v1835 = vadd.f32 %v455, %v1683
        %v1836 = vadd.f32 %v456, %v1347
        %v1837 = vadd.f32 %v457, %v1685
        %v1838 = vadd.f32 %v458, %v1350
        %v1839 = vadd.f32 %v459, %v1688
        %v1840 = vadd.f32 %v460, %v1352
        %v1841 = vadd.f32 %v461, %v1690
        %v1842 = vadd.f32 %v462, %v1355
        %v1843 = vadd.f32 %v463, %v1693
        %v1844 = vadd.f32 %v464, %v1357
        %v1845 = vadd.f32 %v465, %v1695
        %v1846 = vadd.f32 %v466, %v1360
        %v1847 = vadd.f32 %v467, %v1698
        %v1848 = vadd.f32 %v468, %v1362
        %v1849 = vadd.f32 %v469, %v1700
        %v1850 = vadd.f32 %v470, %v1365
        %v1851 = vadd.f32 %v471, %v1703
        %v1852 = vadd.f32 %v472, %v1367
        %v1853 = vadd.f32 %v473, %v1705
        %v1854 = vadd.f32 %v474, %v1370
        %v1855 = vadd.f32 %v475, %v1708
        %v1856 = vadd.f32 %v476, %v1372
        %v1857 = vadd.f32 %v477, %v1710
        %v1858 = vadd.f32 %v478, %v1375
        %v1859 = vadd.f32 %v479, %v1713
        %v1860 = vadd.f32 %v480, %v1377
        %v1861 = vadd.f32 %v481, %v1715
        %v1862 = vadd.f32 %v482, %v1380
        %v1863 = vadd.f32 %v483, %v1718
        %v1864 = vadd.f32 %v484, %v1382
        %v1865 = vadd.f32 %v485, %v1720
        %v1866 = vadd.f32 %v486, %v1385
        %v1867 = vadd.f32 %v487, %v1723
        %v1868 = vadd.f32 %v488, %v1387
        %v1869 = vadd.f32 %v489, %v1725
        %v1870 = vadd.f32 %v490, %v1390
        %v1871 = vadd.f32 %v491, %v1728
        %v1872 = vadd.f32 %v492, %v1392
        %v1873 = vadd.f32 %v493, %v1730
        %v1874 = vadd.f32 %v494, %v1395
        %v1875 = vadd.f32 %v495, %v1733
        %v1876 = vadd.f32 %v496, %v1397
        %v1877 = vadd.f32 %v497, %v1735
        %v1878 = vadd.f32 %v498, %v1400
        %v1879 = vadd.f32 %v499, %v1738
        %v1880 = vadd.f32 %v500, %v1402
        %v1881 = vadd.f32 %v501, %v1740
        %v1882 = vadd.f32 %v502, %v1405
        %v1883 = vadd.f32 %v503, %v1743
        %v1884 = vadd.f32 %v504, %v1407
        %v1885 = vadd.f32 %v505, %v1745
        %v1886 = vadd.f32 %v506, %v1410
        %v1887 = vadd.f32 %v507, %v1748
        %v1888 = vadd.f32 %v508, %v1412
        %v1889 = vadd.f32 %v509, %v1750
        %v1890 = vadd.f32 %v510, %v1415
        %v1891 = vadd.f32 %v511, %v1753
        %v1892 = vadd.f32 %v512, %v1417
        %v1893 = vadd.f32 %v513, %v1755
        %v1894 = vadd.f32 %v514, %v1420
        %v1895 = vadd.f32 %v515, %v1758
        %v1896 = vadd.f32 %v516, %v1422
        %v1897 = vadd.f32 %v517, %v1760
        %v1898 = vadd.f32 %v518, %v1425
        %v1899 = vadd.f32 %v519, %v1763
        %v1900 = vadd.f32 %v520, %v1427
        %v1901 = vadd.f32 %v521, %v1765
        %v1902 = vadd.f32 %v522, %v1430
        %v1903 = vadd.f32 %v523, %v1768
        %v1904 = vadd.f32 %v524, %v1432
        %v1905 = vadd.f32 %v525, %v1770
        %v1906 = vadd.f32 %v526, %v1435
        %v1907 = vadd.f32 %v527, %v1773
        %v1908 = vadd.f32 %v528, %v1437
        %v1909 = vadd.f32 %v529, %v1775
        %v1910 = vadd.f32 %v530, %v1440
        %v1911 = vadd.f32 %v531, %v1778
        %v1912 = vadd.f32 %v532, %v1442
        %v1913 = vadd.f32 %v533, %v1780
        %v1914 = vadd.f32 %v534, %v1445
        %v1915 = vadd.f32 %v535, %v1783
        %v1916 = vadd.f32 %v536, %v1447
        %v1917 = vadd.f32 %v537, %v1785
        %v1918 = vadd.f32 %v538, %v1450
        %v1919 = vadd.f32 %v539, %v1788
        %v1920 = vadd.f32 %v540, %v1452
        %v1921 = vadd.f32 %v541, %v1790
        %v1922 = vadd.f32 %v542, %v1455
        %v1923 = vadd.f32 %v543, %v1793
        %v1924 = vadd.f32 %v544, %v1457
        %v1925 = vadd.f32 %v545, %v1795
        %v1926 = vadd.f32 %v546, %v1460
        %v1927 = vadd.f32 %v547, %v1798
        %v1928 = vadd.f32 %v548, %v1462
        %v1929 = vadd.f32 %v549, %v1800
        %1930 = vst [vmem:[#allocation2] sm:$0xff] %v1802
        %1931 = vst [vmem:[#allocation2 + $0x8] sm:$0xff] %v1803
        %1932 = vst [vmem:[#allocation2 + $0x10] sm:$0xff] %v1804
        %1933 = vst [vmem:[#allocation2 + $0x18] sm:$0xff] %v1805
        %1934 = vst [vmem:[#allocation2 + $0x20] sm:$0xff] %v1806
        %1935 = vst [vmem:[#allocation2 + $0x28] sm:$0xff] %v1807
        %1936 = vst [vmem:[#allocation2 + $0x30] sm:$0xff] %v1808
        %1937 = vst [vmem:[#allocation2 + $0x38] sm:$0xff] %v1809
        %1938 = vst [vmem:[#allocation2 + $0x40] sm:$0xff] %v1810
        %1939 = vst [vmem:[#allocation2 + $0x48] sm:$0xff] %v1811
        %1940 = vst [vmem:[#allocation2 + $0x50] sm:$0xff] %v1812
        %1941 = vst [vmem:[#allocation2 + $0x58] sm:$0xff] %v1813
        %1942 = vst [vmem:[#allocation2 + $0x60] sm:$0xff] %v1814
        %1943 = vst [vmem:[#allocation2 + $0x68] sm:$0xff] %v1815
        %1944 = vst [vmem:[#allocation2 + $0x70] sm:$0xff] %v1816
        %1945 = vst [vmem:[#allocation2 + $0x78] sm:$0xff] %v1817
        %1946 = vst [vmem:[#allocation2 + $0x80] sm:$0xff] %v1818
        %1947 = vst [vmem:[#allocation2 + $0x88] sm:$0xff] %v1819
        %1948 = vst [vmem:[#allocation2 + $0x90] sm:$0xff] %v1820
        %1949 = vst [vmem:[#allocation2 + $0x98] sm:$0xff] %v1821
        %1950 = vst [vmem:[#allocation2 + $0xa0] sm:$0xff] %v1822
        %1951 = vst [vmem:[#allocation2 + $0xa8] sm:$0xff] %v1823
        %1952 = vst [vmem:[#allocation2 + $0xb0] sm:$0xff] %v1824
        %1953 = vst [vmem:[#allocation2 + $0xb8] sm:$0xff] %v1825
        %1954 = vst [vmem:[#allocation2 + $0xc0] sm:$0xff] %v1826
        %1955 = vst [vmem:[#allocation2 + $0xc8] sm:$0xff] %v1827
        %1956 = vst [vmem:[#allocation2 + $0xd0] sm:$0xff] %v1828
        %1957 = vst [vmem:[#allocation2 + $0xd8] sm:$0xff] %v1829
        %1958 = vst [vmem:[#allocation2 + $0xe0] sm:$0xff] %v1830
        %1959 = vst [vmem:[#allocation2 + $0xe8] sm:$0xff] %v1831
        %1960 = vst [vmem:[#allocation2 + $0xf0] sm:$0xff] %v1832
        %1961 = vst [vmem:[#allocation2 + $0xf8] sm:$0xff] %v1833
        %1962 = vst [vmem:[#allocation2 + $0x100] sm:$0xff] %v1834
        %1963 = vst [vmem:[#allocation2 + $0x108] sm:$0xff] %v1835
        %1964 = vst [vmem:[#allocation2 + $0x110] sm:$0xff] %v1836
        %1965 = vst [vmem:[#allocation2 + $0x118] sm:$0xff] %v1837
        %1966 = vst [vmem:[#allocation2 + $0x120] sm:$0xff] %v1838
        %1967 = vst [vmem:[#allocation2 + $0x128] sm:$0xff] %v1839
        %1968 = vst [vmem:[#allocation2 + $0x130] sm:$0xff] %v1840
        %1969 = vst [vmem:[#allocation2 + $0x138] sm:$0xff] %v1841
        %1970 = vst [vmem:[#allocation2 + $0x140] sm:$0xff] %v1842
        %1971 = vst [vmem:[#allocation2 + $0x148] sm:$0xff] %v1843
        %1972 = vst [vmem:[#allocation2 + $0x150] sm:$0xff] %v1844
        %1973 = vst [vmem:[#allocation2 + $0x158] sm:$0xff] %v1845
        %1974 = vst [vmem:[#allocation2 + $0x160] sm:$0xff] %v1846
        %1975 = vst [vmem:[#allocation2 + $0x168] sm:$0xff] %v1847
        %1976 = vst [vmem:[#allocation2 + $0x170] sm:$0xff] %v1848
        %1977 = vst [vmem:[#allocation2 + $0x178] sm:$0xff] %v1849
        %1978 = vst [vmem:[#allocation2 + $0x180] sm:$0xff] %v1850
        %1979 = vst [vmem:[#allocation2 + $0x188] sm:$0xff] %v1851
        %1980 = vst [vmem:[#allocation2 + $0x190] sm:$0xff] %v1852
        %1981 = vst [vmem:[#allocation2 + $0x198] sm:$0xff] %v1853
        %1982 = vst [vmem:[#allocation2 + $0x1a0] sm:$0xff] %v1854
        %1983 = vst [vmem:[#allocation2 + $0x1a8] sm:$0xff] %v1855
        %1984 = vst [vmem:[#allocation2 + $0x1b0] sm:$0xff] %v1856
        %1985 = vst [vmem:[#allocation2 + $0x1b8] sm:$0xff] %v1857
        %1986 = vst [vmem:[#allocation2 + $0x1c0] sm:$0xff] %v1858
        %1987 = vst [vmem:[#allocation2 + $0x1c8] sm:$0xff] %v1859
        %1988 = vst [vmem:[#allocation2 + $0x1d0] sm:$0xff] %v1860
        %1989 = vst [vmem:[#allocation2 + $0x1d8] sm:$0xff] %v1861
        %1990 = vst [vmem:[#allocation2 + $0x1e0] sm:$0xff] %v1862
        %1991 = vst [vmem:[#allocation2 + $0x1e8] sm:$0xff] %v1863
        %1992 = vst [vmem:[#allocation2 + $0x1f0] sm:$0xff] %v1864
        %1993 = vst [vmem:[#allocation2 + $0x1f8] sm:$0xff] %v1865
        %1994 = vst [vmem:[#allocation2 + $0x200] sm:$0xff] %v1866
        %1995 = vst [vmem:[#allocation2 + $0x208] sm:$0xff] %v1867
        %1996 = vst [vmem:[#allocation2 + $0x210] sm:$0xff] %v1868
        %1997 = vst [vmem:[#allocation2 + $0x218] sm:$0xff] %v1869
        %1998 = vst [vmem:[#allocation2 + $0x220] sm:$0xff] %v1870
        %1999 = vst [vmem:[#allocation2 + $0x228] sm:$0xff] %v1871
        %2000 = vst [vmem:[#allocation2 + $0x230] sm:$0xff] %v1872
        %2001 = vst [vmem:[#allocation2 + $0x238] sm:$0xff] %v1873
        %2002 = vst [vmem:[#allocation2 + $0x240] sm:$0xff] %v1874
        %2003 = vst [vmem:[#allocation2 + $0x248] sm:$0xff] %v1875
        %2004 = vst [vmem:[#allocation2 + $0x250] sm:$0xff] %v1876
        %2005 = vst [vmem:[#allocation2 + $0x258] sm:$0xff] %v1877
        %2006 = vst [vmem:[#allocation2 + $0x260] sm:$0xff] %v1878
        %2007 = vst [vmem:[#allocation2 + $0x268] sm:$0xff] %v1879
        %2008 = vst [vmem:[#allocation2 + $0x270] sm:$0xff] %v1880
        %2009 = vst [vmem:[#allocation2 + $0x278] sm:$0xff] %v1881
        %2010 = vst [vmem:[#allocation2 + $0x280] sm:$0xff] %v1882
        %2011 = vst [vmem:[#allocation2 + $0x288] sm:$0xff] %v1883
        %2012 = vst [vmem:[#allocation2 + $0x290] sm:$0xff] %v1884
        %2013 = vst [vmem:[#allocation2 + $0x298] sm:$0xff] %v1885
        %2014 = vst [vmem:[#allocation2 + $0x2a0] sm:$0xff] %v1886
        %2015 = vst [vmem:[#allocation2 + $0x2a8] sm:$0xff] %v1887
        %2016 = vst [vmem:[#allocation2 + $0x2b0] sm:$0xff] %v1888
        %2017 = vst [vmem:[#allocation2 + $0x2b8] sm:$0xff] %v1889
        %2018 = vst [vmem:[#allocation2 + $0x2c0] sm:$0xff] %v1890
        %2019 = vst [vmem:[#allocation2 + $0x2c8] sm:$0xff] %v1891
        %2020 = vst [vmem:[#allocation2 + $0x2d0] sm:$0xff] %v1892
        %2021 = vst [vmem:[#allocation2 + $0x2d8] sm:$0xff] %v1893
        %2022 = vst [vmem:[#allocation2 + $0x2e0] sm:$0xff] %v1894
        %2023 = vst [vmem:[#allocation2 + $0x2e8] sm:$0xff] %v1895
        %2024 = vst [vmem:[#allocation2 + $0x2f0] sm:$0xff] %v1896
        %2025 = vst [vmem:[#allocation2 + $0x2f8] sm:$0xff] %v1897
        %2026 = vst [vmem:[#allocation2 + $0x300] sm:$0xff] %v1898
        %2027 = vst [vmem:[#allocation2 + $0x308] sm:$0xff] %v1899
        %2028 = vst [vmem:[#allocation2 + $0x310] sm:$0xff] %v1900
        %2029 = vst [vmem:[#allocation2 + $0x318] sm:$0xff] %v1901
        %2030 = vst [vmem:[#allocation2 + $0x320] sm:$0xff] %v1902
        %2031 = vst [vmem:[#allocation2 + $0x328] sm:$0xff] %v1903
        %2032 = vst [vmem:[#allocation2 + $0x330] sm:$0xff] %v1904
        %2033 = vst [vmem:[#allocation2 + $0x338] sm:$0xff] %v1905
        %2034 = vst [vmem:[#allocation2 + $0x340] sm:$0xff] %v1906
        %2035 = vst [vmem:[#allocation2 + $0x348] sm:$0xff] %v1907
        %2036 = vst [vmem:[#allocation2 + $0x350] sm:$0xff] %v1908
        %2037 = vst [vmem:[#allocation2 + $0x358] sm:$0xff] %v1909
        %2038 = vst [vmem:[#allocation2 + $0x360] sm:$0xff] %v1910
        %2039 = vst [vmem:[#allocation2 + $0x368] sm:$0xff] %v1911
        %2040 = vst [vmem:[#allocation2 + $0x370] sm:$0xff] %v1912
        %2041 = vst [vmem:[#allocation2 + $0x378] sm:$0xff] %v1913
        %2042 = vst [vmem:[#allocation2 + $0x380] sm:$0xff] %v1914
        %2043 = vst [vmem:[#allocation2 + $0x388] sm:$0xff] %v1915
        %2044 = vst [vmem:[#allocation2 + $0x390] sm:$0xff] %v1916
        %2045 = vst [vmem:[#allocation2 + $0x398] sm:$0xff] %v1917
        %2046 = vst [vmem:[#allocation2 + $0x3a0] sm:$0xff] %v1918
        %2047 = vst [vmem:[#allocation2 + $0x3a8] sm:$0xff] %v1919
        %2048 = vst [vmem:[#allocation2 + $0x3b0] sm:$0xff] %v1920
        %2049 = vst [vmem:[#allocation2 + $0x3b8] sm:$0xff] %v1921
        %2050 = vst [vmem:[#allocation2 + $0x3c0] sm:$0xff] %v1922
        %2051 = vst [vmem:[#allocation2 + $0x3c8] sm:$0xff] %v1923
        %2052 = vst [vmem:[#allocation2 + $0x3d0] sm:$0xff] %v1924
        %2053 = vst [vmem:[#allocation2 + $0x3d8] sm:$0xff] %v1925
        %2054 = vst [vmem:[#allocation2 + $0x3e0] sm:$0xff] %v1926
        %2055 = vst [vmem:[#allocation2 + $0x3e8] sm:$0xff] %v1927
        %2056 = vst [vmem:[#allocation2 + $0x3f0] sm:$0xff] %v1928
        %2057 = vst [vmem:[#allocation2 + $0x3f8] sm:$0xff] %v1929
        // Predicated region
        $region49: #{tpu_custom_call.1} parent=31 // pred_check
          %p2058 = pneg %p290
        $region50: #{tpu_custom_call.1} parent=31 // pred_check_branch
          %2060 = sbr.rel (%p2058) target = $region52
        $region51: #{tpu_custom_call.1} parent=31 // pred_region
          %v2061 = vld [vmem:[#allocation2] sm:$0xff]
          %v2062 = vld [vmem:[#allocation2 + $0x8] sm:$0xff]
          %v2063 = vld [vmem:[#allocation2 + $0x10] sm:$0xff]
          %v2064 = vld [vmem:[#allocation2 + $0x18] sm:$0xff]
          %v2065 = vld [vmem:[#allocation2 + $0x20] sm:$0xff]
          %v2066 = vld [vmem:[#allocation2 + $0x28] sm:$0xff]
          %v2067 = vld [vmem:[#allocation2 + $0x30] sm:$0xff]
          %v2068 = vld [vmem:[#allocation2 + $0x38] sm:$0xff]
          %v2069 = vld [vmem:[#allocation2 + $0x40] sm:$0xff]
          %v2070 = vld [vmem:[#allocation2 + $0x48] sm:$0xff]
          %v2071 = vld [vmem:[#allocation2 + $0x50] sm:$0xff]
          %v2072 = vld [vmem:[#allocation2 + $0x58] sm:$0xff]
          %v2073 = vld [vmem:[#allocation2 + $0x60] sm:$0xff]
          %v2074 = vld [vmem:[#allocation2 + $0x68] sm:$0xff]
          %v2075 = vld [vmem:[#allocation2 + $0x70] sm:$0xff]
          %v2076 = vld [vmem:[#allocation2 + $0x78] sm:$0xff]
          %v2077 = vld [vmem:[#allocation2 + $0x80] sm:$0xff]
          %v2078 = vld [vmem:[#allocation2 + $0x88] sm:$0xff]
          %v2079 = vld [vmem:[#allocation2 + $0x90] sm:$0xff]
          %v2080 = vld [vmem:[#allocation2 + $0x98] sm:$0xff]
          %v2081 = vld [vmem:[#allocation2 + $0xa0] sm:$0xff]
          %v2082 = vld [vmem:[#allocation2 + $0xa8] sm:$0xff]
          %v2083 = vld [vmem:[#allocation2 + $0xb0] sm:$0xff]
          %v2084 = vld [vmem:[#allocation2 + $0xb8] sm:$0xff]
          %v2085 = vld [vmem:[#allocation2 + $0xc0] sm:$0xff]
          %v2086 = vld [vmem:[#allocation2 + $0xc8] sm:$0xff]
          %v2087 = vld [vmem:[#allocation2 + $0xd0] sm:$0xff]
          %v2088 = vld [vmem:[#allocation2 + $0xd8] sm:$0xff]
          %v2089 = vld [vmem:[#allocation2 + $0xe0] sm:$0xff]
          %v2090 = vld [vmem:[#allocation2 + $0xe8] sm:$0xff]
          %v2091 = vld [vmem:[#allocation2 + $0xf0] sm:$0xff]
          %v2092 = vld [vmem:[#allocation2 + $0xf8] sm:$0xff]
          %v2093 = vld [vmem:[#allocation2 + $0x100] sm:$0xff]
          %v2094 = vld [vmem:[#allocation2 + $0x108] sm:$0xff]
          %v2095 = vld [vmem:[#allocation2 + $0x110] sm:$0xff]
          %v2096 = vld [vmem:[#allocation2 + $0x118] sm:$0xff]
          %v2097 = vld [vmem:[#allocation2 + $0x120] sm:$0xff]
          %v2098 = vld [vmem:[#allocation2 + $0x128] sm:$0xff]
          %v2099 = vld [vmem:[#allocation2 + $0x130] sm:$0xff]
          %v2100 = vld [vmem:[#allocation2 + $0x138] sm:$0xff]
          %v2101 = vld [vmem:[#allocation2 + $0x140] sm:$0xff]
          %v2102 = vld [vmem:[#allocation2 + $0x148] sm:$0xff]
          %v2103 = vld [vmem:[#allocation2 + $0x150] sm:$0xff]
          %v2104 = vld [vmem:[#allocation2 + $0x158] sm:$0xff]
          %v2105 = vld [vmem:[#allocation2 + $0x160] sm:$0xff]
          %v2106 = vld [vmem:[#allocation2 + $0x168] sm:$0xff]
          %v2107 = vld [vmem:[#allocation2 + $0x170] sm:$0xff]
          %v2108 = vld [vmem:[#allocation2 + $0x178] sm:$0xff]
          %v2109 = vld [vmem:[#allocation2 + $0x180] sm:$0xff]
          %v2110 = vld [vmem:[#allocation2 + $0x188] sm:$0xff]
          %v2111 = vld [vmem:[#allocation2 + $0x190] sm:$0xff]
          %v2112 = vld [vmem:[#allocation2 + $0x198] sm:$0xff]
          %v2113 = vld [vmem:[#allocation2 + $0x1a0] sm:$0xff]
          %v2114 = vld [vmem:[#allocation2 + $0x1a8] sm:$0xff]
          %v2115 = vld [vmem:[#allocation2 + $0x1b0] sm:$0xff]
          %v2116 = vld [vmem:[#allocation2 + $0x1b8] sm:$0xff]
          %v2117 = vld [vmem:[#allocation2 + $0x1c0] sm:$0xff]
          %v2118 = vld [vmem:[#allocation2 + $0x1c8] sm:$0xff]
          %v2119 = vld [vmem:[#allocation2 + $0x1d0] sm:$0xff]
          %v2120 = vld [vmem:[#allocation2 + $0x1d8] sm:$0xff]
          %v2121 = vld [vmem:[#allocation2 + $0x1e0] sm:$0xff]
          %v2122 = vld [vmem:[#allocation2 + $0x1e8] sm:$0xff]
          %v2123 = vld [vmem:[#allocation2 + $0x1f0] sm:$0xff]
          %v2124 = vld [vmem:[#allocation2 + $0x1f8] sm:$0xff]
          %v2125 = vld [vmem:[#allocation2 + $0x200] sm:$0xff]
          %v2126 = vld [vmem:[#allocation2 + $0x208] sm:$0xff]
          %v2127 = vld [vmem:[#allocation2 + $0x210] sm:$0xff]
          %v2128 = vld [vmem:[#allocation2 + $0x218] sm:$0xff]
          %v2129 = vld [vmem:[#allocation2 + $0x220] sm:$0xff]
          %v2130 = vld [vmem:[#allocation2 + $0x228] sm:$0xff]
          %v2131 = vld [vmem:[#allocation2 + $0x230] sm:$0xff]
          %v2132 = vld [vmem:[#allocation2 + $0x238] sm:$0xff]
          %v2133 = vld [vmem:[#allocation2 + $0x240] sm:$0xff]
          %v2134 = vld [vmem:[#allocation2 + $0x248] sm:$0xff]
          %v2135 = vld [vmem:[#allocation2 + $0x250] sm:$0xff]
          %v2136 = vld [vmem:[#allocation2 + $0x258] sm:$0xff]
          %v2137 = vld [vmem:[#allocation2 + $0x260] sm:$0xff]
          %v2138 = vld [vmem:[#allocation2 + $0x268] sm:$0xff]
          %v2139 = vld [vmem:[#allocation2 + $0x270] sm:$0xff]
          %v2140 = vld [vmem:[#allocation2 + $0x278] sm:$0xff]
          %v2141 = vld [vmem:[#allocation2 + $0x280] sm:$0xff]
          %v2142 = vld [vmem:[#allocation2 + $0x288] sm:$0xff]
          %v2143 = vld [vmem:[#allocation2 + $0x290] sm:$0xff]
          %v2144 = vld [vmem:[#allocation2 + $0x298] sm:$0xff]
          %v2145 = vld [vmem:[#allocation2 + $0x2a0] sm:$0xff]
          %v2146 = vld [vmem:[#allocation2 + $0x2a8] sm:$0xff]
          %v2147 = vld [vmem:[#allocation2 + $0x2b0] sm:$0xff]
          %v2148 = vld [vmem:[#allocation2 + $0x2b8] sm:$0xff]
          %v2149 = vld [vmem:[#allocation2 + $0x2c0] sm:$0xff]
          %v2150 = vld [vmem:[#allocation2 + $0x2c8] sm:$0xff]
          %v2151 = vld [vmem:[#allocation2 + $0x2d0] sm:$0xff]
          %v2152 = vld [vmem:[#allocation2 + $0x2d8] sm:$0xff]
          %v2153 = vld [vmem:[#allocation2 + $0x2e0] sm:$0xff]
          %v2154 = vld [vmem:[#allocation2 + $0x2e8] sm:$0xff]
          %v2155 = vld [vmem:[#allocation2 + $0x2f0] sm:$0xff]
          %v2156 = vld [vmem:[#allocation2 + $0x2f8] sm:$0xff]
          %v2157 = vld [vmem:[#allocation2 + $0x300] sm:$0xff]
          %v2158 = vld [vmem:[#allocation2 + $0x308] sm:$0xff]
          %v2159 = vld [vmem:[#allocation2 + $0x310] sm:$0xff]
          %v2160 = vld [vmem:[#allocation2 + $0x318] sm:$0xff]
          %v2161 = vld [vmem:[#allocation2 + $0x320] sm:$0xff]
          %v2162 = vld [vmem:[#allocation2 + $0x328] sm:$0xff]
          %v2163 = vld [vmem:[#allocation2 + $0x330] sm:$0xff]
          %v2164 = vld [vmem:[#allocation2 + $0x338] sm:$0xff]
          %v2165 = vld [vmem:[#allocation2 + $0x340] sm:$0xff]
          %v2166 = vld [vmem:[#allocation2 + $0x348] sm:$0xff]
          %v2167 = vld [vmem:[#allocation2 + $0x350] sm:$0xff]
          %v2168 = vld [vmem:[#allocation2 + $0x358] sm:$0xff]
          %v2169 = vld [vmem:[#allocation2 + $0x360] sm:$0xff]
          %v2170 = vld [vmem:[#allocation2 + $0x368] sm:$0xff]
          %v2171 = vld [vmem:[#allocation2 + $0x370] sm:$0xff]
          %v2172 = vld [vmem:[#allocation2 + $0x378] sm:$0xff]
          %v2173 = vld [vmem:[#allocation2 + $0x380] sm:$0xff]
          %v2174 = vld [vmem:[#allocation2 + $0x388] sm:$0xff]
          %v2175 = vld [vmem:[#allocation2 + $0x390] sm:$0xff]
          %v2176 = vld [vmem:[#allocation2 + $0x398] sm:$0xff]
          %v2177 = vld [vmem:[#allocation2 + $0x3a0] sm:$0xff]
          %v2178 = vld [vmem:[#allocation2 + $0x3a8] sm:$0xff]
          %v2179 = vld [vmem:[#allocation2 + $0x3b0] sm:$0xff]
          %v2180 = vld [vmem:[#allocation2 + $0x3b8] sm:$0xff]
          %v2181 = vld [vmem:[#allocation2 + $0x3c0] sm:$0xff]
          %v2182 = vld [vmem:[#allocation2 + $0x3c8] sm:$0xff]
          %v2183 = vld [vmem:[#allocation2 + $0x3d0] sm:$0xff]
          %v2184 = vld [vmem:[#allocation2 + $0x3d8] sm:$0xff]
          %v2185 = vld [vmem:[#allocation2 + $0x3e0] sm:$0xff]
          %v2186 = vld [vmem:[#allocation2 + $0x3e8] sm:$0xff]
          %v2187 = vld [vmem:[#allocation2 + $0x3f0] sm:$0xff]
          %v2188 = vld [vmem:[#allocation2 + $0x3f8] sm:$0xff]
          %v2189 = vld [vmem:[%s254] sm:$0x3]
          %v2191 = vperm.slane %v2189, 0
          %v2192 = vperm.slane %v2189, 1
          %v2195 = vadd.f32 %v2061, %v2191
          %v2196 = vadd.f32 %v2062, %v2192
          %v2197 = vadd.f32 %v2063, %v2191
          %v2198 = vadd.f32 %v2064, %v2192
          %v2199 = vadd.f32 %v2065, %v2191
          %v2200 = vadd.f32 %v2066, %v2192
          %v2201 = vadd.f32 %v2067, %v2191
          %v2202 = vadd.f32 %v2068, %v2192
          %v2203 = vadd.f32 %v2069, %v2191
          %v2204 = vadd.f32 %v2070, %v2192
          %v2205 = vadd.f32 %v2071, %v2191
          %v2206 = vadd.f32 %v2072, %v2192
          %v2207 = vadd.f32 %v2073, %v2191
          %v2208 = vadd.f32 %v2074, %v2192
          %v2209 = vadd.f32 %v2075, %v2191
          %v2210 = vadd.f32 %v2076, %v2192
          %v2211 = vadd.f32 %v2077, %v2191
          %v2212 = vadd.f32 %v2078, %v2192
          %v2213 = vadd.f32 %v2079, %v2191
          %v2214 = vadd.f32 %v2080, %v2192
          %v2215 = vadd.f32 %v2081, %v2191
          %v2216 = vadd.f32 %v2082, %v2192
          %v2217 = vadd.f32 %v2083, %v2191
          %v2218 = vadd.f32 %v2084, %v2192
          %v2219 = vadd.f32 %v2085, %v2191
          %v2220 = vadd.f32 %v2086, %v2192
          %v2221 = vadd.f32 %v2087, %v2191
          %v2222 = vadd.f32 %v2088, %v2192
          %v2223 = vadd.f32 %v2089, %v2191
          %v2224 = vadd.f32 %v2090, %v2192
          %v2225 = vadd.f32 %v2091, %v2191
          %v2226 = vadd.f32 %v2092, %v2192
          %v2227 = vadd.f32 %v2093, %v2191
          %v2228 = vadd.f32 %v2094, %v2192
          %v2229 = vadd.f32 %v2095, %v2191
          %v2230 = vadd.f32 %v2096, %v2192
          %v2231 = vadd.f32 %v2097, %v2191
          %v2232 = vadd.f32 %v2098, %v2192
          %v2233 = vadd.f32 %v2099, %v2191
          %v2234 = vadd.f32 %v2100, %v2192
          %v2235 = vadd.f32 %v2101, %v2191
          %v2236 = vadd.f32 %v2102, %v2192
          %v2237 = vadd.f32 %v2103, %v2191
          %v2238 = vadd.f32 %v2104, %v2192
          %v2239 = vadd.f32 %v2105, %v2191
          %v2240 = vadd.f32 %v2106, %v2192
          %v2241 = vadd.f32 %v2107, %v2191
          %v2242 = vadd.f32 %v2108, %v2192
          %v2243 = vadd.f32 %v2109, %v2191
          %v2244 = vadd.f32 %v2110, %v2192
          %v2245 = vadd.f32 %v2111, %v2191
          %v2246 = vadd.f32 %v2112, %v2192
          %v2247 = vadd.f32 %v2113, %v2191
          %v2248 = vadd.f32 %v2114, %v2192
          %v2249 = vadd.f32 %v2115, %v2191
          %v2250 = vadd.f32 %v2116, %v2192
          %v2251 = vadd.f32 %v2117, %v2191
          %v2252 = vadd.f32 %v2118, %v2192
          %v2253 = vadd.f32 %v2119, %v2191
          %v2254 = vadd.f32 %v2120, %v2192
          %v2255 = vadd.f32 %v2121, %v2191
          %v2256 = vadd.f32 %v2122, %v2192
          %v2257 = vadd.f32 %v2123, %v2191
          %v2258 = vadd.f32 %v2124, %v2192
          %v2259 = vadd.f32 %v2125, %v2191
          %v2260 = vadd.f32 %v2126, %v2192
          %v2261 = vadd.f32 %v2127, %v2191
          %v2262 = vadd.f32 %v2128, %v2192
          %v2263 = vadd.f32 %v2129, %v2191
          %v2264 = vadd.f32 %v2130, %v2192
          %v2265 = vadd.f32 %v2131, %v2191
          %v2266 = vadd.f32 %v2132, %v2192
          %v2267 = vadd.f32 %v2133, %v2191
          %v2268 = vadd.f32 %v2134, %v2192
          %v2269 = vadd.f32 %v2135, %v2191
          %v2270 = vadd.f32 %v2136, %v2192
          %v2271 = vadd.f32 %v2137, %v2191
          %v2272 = vadd.f32 %v2138, %v2192
          %v2273 = vadd.f32 %v2139, %v2191
          %v2274 = vadd.f32 %v2140, %v2192
          %v2275 = vadd.f32 %v2141, %v2191
          %v2276 = vadd.f32 %v2142, %v2192
          %v2277 = vadd.f32 %v2143, %v2191
          %v2278 = vadd.f32 %v2144, %v2192
          %v2279 = vadd.f32 %v2145, %v2191
          %v2280 = vadd.f32 %v2146, %v2192
          %v2281 = vadd.f32 %v2147, %v2191
          %v2282 = vadd.f32 %v2148, %v2192
          %v2283 = vadd.f32 %v2149, %v2191
          %v2284 = vadd.f32 %v2150, %v2192
          %v2285 = vadd.f32 %v2151, %v2191
          %v2286 = vadd.f32 %v2152, %v2192
          %v2287 = vadd.f32 %v2153, %v2191
          %v2288 = vadd.f32 %v2154, %v2192
          %v2289 = vadd.f32 %v2155, %v2191
          %v2290 = vadd.f32 %v2156, %v2192
          %v2291 = vadd.f32 %v2157, %v2191
          %v2292 = vadd.f32 %v2158, %v2192
          %v2293 = vadd.f32 %v2159, %v2191
          %v2294 = vadd.f32 %v2160, %v2192
          %v2295 = vadd.f32 %v2161, %v2191
          %v2296 = vadd.f32 %v2162, %v2192
          %v2297 = vadd.f32 %v2163, %v2191
          %v2298 = vadd.f32 %v2164, %v2192
          %v2299 = vadd.f32 %v2165, %v2191
          %v2300 = vadd.f32 %v2166, %v2192
          %v2301 = vadd.f32 %v2167, %v2191
          %v2302 = vadd.f32 %v2168, %v2192
          %v2303 = vadd.f32 %v2169, %v2191
          %v2304 = vadd.f32 %v2170, %v2192
          %v2305 = vadd.f32 %v2171, %v2191
          %v2306 = vadd.f32 %v2172, %v2192
          %v2307 = vadd.f32 %v2173, %v2191
          %v2308 = vadd.f32 %v2174, %v2192
          %v2309 = vadd.f32 %v2175, %v2191
          %v2310 = vadd.f32 %v2176, %v2192
          %v2311 = vadd.f32 %v2177, %v2191
          %v2312 = vadd.f32 %v2178, %v2192
          %v2313 = vadd.f32 %v2179, %v2191
          %v2314 = vadd.f32 %v2180, %v2192
          %v2315 = vadd.f32 %v2181, %v2191
          %v2316 = vadd.f32 %v2182, %v2192
          %v2317 = vadd.f32 %v2183, %v2191
          %v2318 = vadd.f32 %v2184, %v2192
          %v2319 = vadd.f32 %v2185, %v2191
          %v2320 = vadd.f32 %v2186, %v2192
          %v2321 = vadd.f32 %v2187, %v2191
          %v2322 = vadd.f32 %v2188, %v2192
          %v2323 = vpack.c.bf16 %v2196, %v2195
          %v2324 = vpack.c.bf16 %v2198, %v2197
          %v2325 = vpack.c.bf16 %v2200, %v2199
          %v2326 = vpack.c.bf16 %v2202, %v2201
          %v2327 = vpack.c.bf16 %v2204, %v2203
          %v2328 = vpack.c.bf16 %v2206, %v2205
          %v2329 = vpack.c.bf16 %v2208, %v2207
          %v2330 = vpack.c.bf16 %v2210, %v2209
          %v2331 = vpack.c.bf16 %v2212, %v2211
          %v2332 = vpack.c.bf16 %v2214, %v2213
          %v2333 = vpack.c.bf16 %v2216, %v2215
          %v2334 = vpack.c.bf16 %v2218, %v2217
          %v2335 = vpack.c.bf16 %v2220, %v2219
          %v2336 = vpack.c.bf16 %v2222, %v2221
          %v2337 = vpack.c.bf16 %v2224, %v2223
          %v2338 = vpack.c.bf16 %v2226, %v2225
          %v2339 = vpack.c.bf16 %v2228, %v2227
          %v2340 = vpack.c.bf16 %v2230, %v2229
          %v2341 = vpack.c.bf16 %v2232, %v2231
          %v2342 = vpack.c.bf16 %v2234, %v2233
          %v2343 = vpack.c.bf16 %v2236, %v2235
          %v2344 = vpack.c.bf16 %v2238, %v2237
          %v2345 = vpack.c.bf16 %v2240, %v2239
          %v2346 = vpack.c.bf16 %v2242, %v2241
          %v2347 = vpack.c.bf16 %v2244, %v2243
          %v2348 = vpack.c.bf16 %v2246, %v2245
          %v2349 = vpack.c.bf16 %v2248, %v2247
          %v2350 = vpack.c.bf16 %v2250, %v2249
          %v2351 = vpack.c.bf16 %v2252, %v2251
          %v2352 = vpack.c.bf16 %v2254, %v2253
          %v2353 = vpack.c.bf16 %v2256, %v2255
          %v2354 = vpack.c.bf16 %v2258, %v2257
          %v2355 = vpack.c.bf16 %v2260, %v2259
          %v2356 = vpack.c.bf16 %v2262, %v2261
          %v2357 = vpack.c.bf16 %v2264, %v2263
          %v2358 = vpack.c.bf16 %v2266, %v2265
          %v2359 = vpack.c.bf16 %v2268, %v2267
          %v2360 = vpack.c.bf16 %v2270, %v2269
          %v2361 = vpack.c.bf16 %v2272, %v2271
          %v2362 = vpack.c.bf16 %v2274, %v2273
          %v2363 = vpack.c.bf16 %v2276, %v2275
          %v2364 = vpack.c.bf16 %v2278, %v2277
          %v2365 = vpack.c.bf16 %v2280, %v2279
          %v2366 = vpack.c.bf16 %v2282, %v2281
          %v2367 = vpack.c.bf16 %v2284, %v2283
          %v2368 = vpack.c.bf16 %v2286, %v2285
          %v2369 = vpack.c.bf16 %v2288, %v2287
          %v2370 = vpack.c.bf16 %v2290, %v2289
          %v2371 = vpack.c.bf16 %v2292, %v2291
          %v2372 = vpack.c.bf16 %v2294, %v2293
          %v2373 = vpack.c.bf16 %v2296, %v2295
          %v2374 = vpack.c.bf16 %v2298, %v2297
          %v2375 = vpack.c.bf16 %v2300, %v2299
          %v2376 = vpack.c.bf16 %v2302, %v2301
          %v2377 = vpack.c.bf16 %v2304, %v2303
          %v2378 = vpack.c.bf16 %v2306, %v2305
          %v2379 = vpack.c.bf16 %v2308, %v2307
          %v2380 = vpack.c.bf16 %v2310, %v2309
          %v2381 = vpack.c.bf16 %v2312, %v2311
          %v2382 = vpack.c.bf16 %v2314, %v2313
          %v2383 = vpack.c.bf16 %v2316, %v2315
          %v2384 = vpack.c.bf16 %v2318, %v2317
          %v2385 = vpack.c.bf16 %v2320, %v2319
          %v2386 = vpack.c.bf16 %v2322, %v2321
          %2387 = vst [vmem:[%s282] sm:$0xff] %v2323
          %2388 = vst [vmem:[%s282 + $0x8] sm:$0xff] %v2324
          %2389 = vst [vmem:[%s282 + $0x10] sm:$0xff] %v2325
          %2390 = vst [vmem:[%s282 + $0x18] sm:$0xff] %v2326
          %2391 = vst [vmem:[%s282 + $0x20] sm:$0xff] %v2327
          %2392 = vst [vmem:[%s282 + $0x28] sm:$0xff] %v2328
          %2393 = vst [vmem:[%s282 + $0x30] sm:$0xff] %v2329
          %2394 = vst [vmem:[%s282 + $0x38] sm:$0xff] %v2330
          %2395 = vst [vmem:[%s282 + $0x40] sm:$0xff] %v2331
          %2396 = vst [vmem:[%s282 + $0x48] sm:$0xff] %v2332
          %2397 = vst [vmem:[%s282 + $0x50] sm:$0xff] %v2333
          %2398 = vst [vmem:[%s282 + $0x58] sm:$0xff] %v2334
          %2399 = vst [vmem:[%s282 + $0x60] sm:$0xff] %v2335
          %2400 = vst [vmem:[%s282 + $0x68] sm:$0xff] %v2336
          %2401 = vst [vmem:[%s282 + $0x70] sm:$0xff] %v2337
          %2402 = vst [vmem:[%s282 + $0x78] sm:$0xff] %v2338
          %2403 = vst [vmem:[%s282 + $0x80] sm:$0xff] %v2339
          %2404 = vst [vmem:[%s282 + $0x88] sm:$0xff] %v2340
          %2405 = vst [vmem:[%s282 + $0x90] sm:$0xff] %v2341
          %2406 = vst [vmem:[%s282 + $0x98] sm:$0xff] %v2342
          %2407 = vst [vmem:[%s282 + $0xa0] sm:$0xff] %v2343
          %2408 = vst [vmem:[%s282 + $0xa8] sm:$0xff] %v2344
          %2409 = vst [vmem:[%s282 + $0xb0] sm:$0xff] %v2345
          %2410 = vst [vmem:[%s282 + $0xb8] sm:$0xff] %v2346
          %2411 = vst [vmem:[%s282 + $0xc0] sm:$0xff] %v2347
          %2412 = vst [vmem:[%s282 + $0xc8] sm:$0xff] %v2348
          %2413 = vst [vmem:[%s282 + $0xd0] sm:$0xff] %v2349
          %2414 = vst [vmem:[%s282 + $0xd8] sm:$0xff] %v2350
          %2415 = vst [vmem:[%s282 + $0xe0] sm:$0xff] %v2351
          %2416 = vst [vmem:[%s282 + $0xe8] sm:$0xff] %v2352
          %2417 = vst [vmem:[%s282 + $0xf0] sm:$0xff] %v2353
          %2418 = vst [vmem:[%s282 + $0xf8] sm:$0xff] %v2354
          %2419 = vst [vmem:[%s282 + $0x100] sm:$0xff] %v2355
          %2420 = vst [vmem:[%s282 + $0x108] sm:$0xff] %v2356
          %2421 = vst [vmem:[%s282 + $0x110] sm:$0xff] %v2357
          %2422 = vst [vmem:[%s282 + $0x118] sm:$0xff] %v2358
          %2423 = vst [vmem:[%s282 + $0x120] sm:$0xff] %v2359
          %2424 = vst [vmem:[%s282 + $0x128] sm:$0xff] %v2360
          %2425 = vst [vmem:[%s282 + $0x130] sm:$0xff] %v2361
          %2426 = vst [vmem:[%s282 + $0x138] sm:$0xff] %v2362
          %2427 = vst [vmem:[%s282 + $0x140] sm:$0xff] %v2363
          %2428 = vst [vmem:[%s282 + $0x148] sm:$0xff] %v2364
          %2429 = vst [vmem:[%s282 + $0x150] sm:$0xff] %v2365
          %2430 = vst [vmem:[%s282 + $0x158] sm:$0xff] %v2366
          %2431 = vst [vmem:[%s282 + $0x160] sm:$0xff] %v2367
          %2432 = vst [vmem:[%s282 + $0x168] sm:$0xff] %v2368
          %2433 = vst [vmem:[%s282 + $0x170] sm:$0xff] %v2369
          %2434 = vst [vmem:[%s282 + $0x178] sm:$0xff] %v2370
          %2435 = vst [vmem:[%s282 + $0x180] sm:$0xff] %v2371
          %2436 = vst [vmem:[%s282 + $0x188] sm:$0xff] %v2372
          %2437 = vst [vmem:[%s282 + $0x190] sm:$0xff] %v2373
          %2438 = vst [vmem:[%s282 + $0x198] sm:$0xff] %v2374
          %2439 = vst [vmem:[%s282 + $0x1a0] sm:$0xff] %v2375
          %2440 = vst [vmem:[%s282 + $0x1a8] sm:$0xff] %v2376
          %2441 = vst [vmem:[%s282 + $0x1b0] sm:$0xff] %v2377
          %2442 = vst [vmem:[%s282 + $0x1b8] sm:$0xff] %v2378
          %2443 = vst [vmem:[%s282 + $0x1c0] sm:$0xff] %v2379
          %2444 = vst [vmem:[%s282 + $0x1c8] sm:$0xff] %v2380
          %2445 = vst [vmem:[%s282 + $0x1d0] sm:$0xff] %v2381
          %2446 = vst [vmem:[%s282 + $0x1d8] sm:$0xff] %v2382
          %2447 = vst [vmem:[%s282 + $0x1e0] sm:$0xff] %v2383
          %2448 = vst [vmem:[%s282 + $0x1e8] sm:$0xff] %v2384
          %2449 = vst [vmem:[%s282 + $0x1f0] sm:$0xff] %v2385
          %2450 = vst [vmem:[%s282 + $0x1f8] sm:$0xff] %v2386
        $region52: #{tpu_custom_call.1} parent=31 // pred_fallthru
          _
        %s2451 = sand.u32 %s132, 1
        %s2452 = scalar_lea.sflag [#allocation5], %s2451
        %s2453 = sand.u32 %s132, 1
        %s2454 = smul.addr %s2453, 512
        %s2455 = scalar_lea.vmem [#allocation9], %s2454
        // Predicated region
        $region53: #{tpu_custom_call.1} parent=31 // pred_check
          %p2456 = pneg %p142
        $region54: #{tpu_custom_call.1} parent=31 // pred_check_branch
          %2458 = sbr.rel (%p2456) target = $region56
        $region55: #{tpu_custom_call.1} parent=31 // pred_region
          %s2459 = smul.u32 64, %s26
          %s2460 = smul.u32 2, %s27
          %2462 = vsyncadd %s2452, 0
          %s2463 = smul.addr %s2459, 6
          %s2464 = sadd.s32 %s2460, %s2463
          %s2465 = smul.addr %s2464, 4
          %s2466 = scalar_lea.hbm %s3, %s2465
          %s2467 = sshll.u32 %s2455, 4
          %s2468 = int_to_ptr.vmem [resolvable:$true] %s2467
          %s2469 = sshll.u32 %s2466, 4
          %s2470 = int_to_ptr.hbm [resolvable:$true] %s2469
          %2475 = dma.vmem_to_hbm [thread:$0]  %s2468, 8192, %s2470, %s2452, 128, 384, 8
        $region56: #{tpu_custom_call.1} parent=31 // pred_fallthru
          _
      $region32: #{tpu_custom_call.1} parent=5 // pred_fallthru
        _
      %p2476 = scmp.le.s32.totalorder 2, %s16
      // Predicated region
      $region57: #{tpu_custom_call.1} parent=5 // pred_check
        %p2477 = pneg %p2476
      $region58: #{tpu_custom_call.1} parent=5 // pred_check_branch
        %2479 = sbr.rel (%p2477) target = $region60
      $region59: #{tpu_custom_call.1} parent=5 // pred_region
        %s2480 = ssub.s32 %s16, 2
        // Predicated region
        $region61: #{tpu_custom_call.1} parent=59 // pred_check
          %p2481 = pneg %p148
        $region62: #{tpu_custom_call.1} parent=59 // pred_check_branch
          %2483 = sbr.rel (%p2481) target = $region64
        $region63: #{tpu_custom_call.1} parent=59 // pred_region
          %s2484 = sand.u32 %s133, 1
          %s2485 = scalar_lea.sflag [#allocation5], %s2484
          %s2486 = sand.u32 %s133, 1
          %s2487 = smul.addr %s2486, 512
          %s2488 = scalar_lea.vmem [#allocation9], %s2487
          %2490 = dma.done %s2485, 8192
        $region64: #{tpu_custom_call.1} parent=59 // pred_fallthru
          _
      $region60: #{tpu_custom_call.1} parent=5 // pred_fallthru
        _
    $region6: #{tpu_custom_call.1} parent=1 // loop_footer
      %s20 = sadd.s32 1, %s16
    $region7: #{tpu_custom_call.1} parent=1 // loop_footer_branch
      %15 = sbr.rel target = $region3
    $region8: #{tpu_custom_call.1} parent=1 // loop_exit
      _
    %2491 = vsyncpa [#allocation4], 1
    %s2492 = scalar_lea.sflag [#allocation4], 1
    %2493 = vsyncpa %s2492, 1
    %2494 = vsyncpa [#allocation7], 1
    %s2495 = scalar_lea.sflag [#allocation7], 1
    %2496 = vsyncpa %s2495, 1
    %2497 = vsyncpa [#allocation5], 1
    %s2498 = scalar_lea.sflag [#allocation5], 1
    %2499 = vsyncpa %s2498, 1

</llo_original>
